<compile_context>
chip_gen: v6e
topology: v6e:2x2x1
jax: 0.10.0
libtpu: 0.0.40
codegen_flags: <defaults>
</compile_context>

<pallas_src>
import jax
import jax.numpy as jnp
from jax.experimental import pallas as pl
from jax.experimental.pallas import tpu as pltpu


def _relu(x):
    return jnp.maximum(x, 0.0)


def simple_pointnet_kernel(p_ref, w_ref, fb_ref, out_ref):
    # p_ref : (T, blk_b, D)  f32   point-major input block
    # w_ref : (8, W, W)      bf16  [w0, w1a, w1b, w2a, w2b, w3a, w3b, wc], zero-padded
    # fb_ref: (D+6, W)       f32   rows [0:D]=w_pos, then b_pos,b0,b1,b2,b3,bc
    # out_ref: (blk_b, W)    f32
    T, blk_b, D = p_ref.shape
    M = T * blk_b
    W = w_ref.shape[-1]

    def dot_bf16(x_f32, w_bf16):
        # MXU-friendly: bf16 inputs, f32 accumulation.
        return jnp.dot(x_f32.astype(jnp.bfloat16), w_bf16,
                       preferred_element_type=jnp.float32)

    def bias(j):
        return fb_ref[D + j:D + j + 1, :]            # (1, W) f32, static slice

    # fc_pos — keep the raw coordinates in f32 (K = D is tiny, MXU cost ~free).
    p = p_ref[...].reshape(M, D)                      # (M, D) f32
    w_pos = fb_ref[0:D, :]                            # (D, W) f32
    net = jnp.dot(p, w_pos, preferred_element_type=jnp.float32) + bias(0)

    # fc_0
    net = dot_bf16(_relu(net), w_ref[0]) + bias(1)    # (M, W)

    def fused_block(net, wa, wb, b):
        r = _relu(net)                                # (M, W) f32
        # Per-sample max over points: reduce over the OUTER axis (VPU, not XLU).
        pooled = jnp.max(r.reshape(T, blk_b, W), axis=0)        # (blk_b, W)
        out = dot_bf16(r, wa)                         # (M, W)
        out_pooled = dot_bf16(pooled, wb) + b         # (blk_b, W)
        out = out.reshape(T, blk_b, W) + out_pooled[None, :, :]  # free slab repeat
        return out.reshape(M, W)

    net = fused_block(net, w_ref[1], w_ref[2], bias(2))   # fc_1
    net = fused_block(net, w_ref[3], w_ref[4], bias(3))   # fc_2
    net = fused_block(net, w_ref[5], w_ref[6], bias(4))   # fc_3

    # Global per-sample max-pool over points, then fc_c(relu(.)).
    r = _relu(net)
    pooled = jnp.max(r.reshape(T, blk_b, W), axis=0)       # (blk_b, W)
    out_ref[...] = dot_bf16(pooled, w_ref[7]) + bias(5)    # (blk_b, W) lane-dense


def _pack_params(params, W):
    """Pack the 14 parameter arrays into one bf16 weight slab and one f32 slab."""
    H = params["w0"].shape[1]

    def pad2(a):
        return jnp.pad(a, ((0, W - a.shape[0]), (0, W - a.shape[1])))

    mats = [params["w0"],
            params["w1"][:H], params["w1"][H:],
            params["w2"][:H], params["w2"][H:],
            params["w3"][:H], params["w3"][H:],
            params["wc"]]
    w_slab = jnp.stack([pad2(m).astype(jnp.bfloat16) for m in mats])   # (8, W, W)

    def padc(a):
        return jnp.pad(a, ((0, 0), (0, W - a.shape[1])))

    rows = [params["w_pos"],                                            # (D, 2H)
            params["b_pos"], params["b0"], params["b1"],
            params["b2"], params["b3"], params["bc"]]
    fb_slab = jnp.concatenate([padc(a) for a in rows], axis=0)          # (D+6, W)
    return w_slab, fb_slab.astype(jnp.float32)


def simple_pointnet_forward(p, params, block_b=None):
    """p: (B, T, D) float32.  params: dict of (in, out) weights / (1, out) biases.

    block_b=None (default): whole batch in one grid step (best for v5e/v6e).
    On v7x pass block_b = ceil(B/2) to split the batch across the 2 TensorCores.
    """
    B, T, D = p.shape
    H2 = params["w0"].shape[0]           # 2 * hidden_dim
    c_dim = params["wc"].shape[1]
    W = ((max(H2, c_dim) + 127) // 128) * 128   # uniform lane-dense width

    if block_b is None:
        block_b = B
    block_b = max(8, ((block_b + 7) // 8) * 8)   # keep reshapes layout-preserving
    n_blocks = pl.cdiv(B, block_b)
    b_pad = n_blocks * block_b

    # Point-major layout: per-sample pooling becomes an outer-axis reduction.
    pt = jnp.transpose(p, (1, 0, 2))             # (T, B, D)
    if b_pad != B:
        pt = jnp.pad(pt, ((0, 0), (0, b_pad - B), (0, 0)))

    w_slab, fb_slab = _pack_params(params, W)

    out = pl.pallas_call(
        simple_pointnet_kernel,
        out_shape=jax.ShapeDtypeStruct((b_pad, W), jnp.float32),
        grid_spec=pltpu.PrefetchScalarGridSpec(
            num_scalar_prefetch=0,
            grid=(n_blocks,),
            in_specs=[
                pl.BlockSpec((T, block_b, D), lambda b: (0, b, 0)),
                pl.BlockSpec(w_slab.shape, lambda b: (0, 0, 0)),
                pl.BlockSpec(fb_slab.shape, lambda b: (0, 0)),
            ],
            out_specs=pl.BlockSpec((block_b, W), lambda b: (b, 0)),
        ),
        compiler_params=pltpu.CompilerParams(
            dimension_semantics=("parallel",),
            vmem_limit_bytes=32 * 1024 * 1024,
        ),
    )(pt, w_slab, fb_slab)

    return out[:B, :c_dim]


def init_params(key, dim=3, hidden_dim=32, c_dim=32):
    """Deterministic synthetic parameters (PyTorch Linear shapes, stored transposed)."""
    keys = jax.random.split(key, 12)
    H = hidden_dim

    def lin(kw, kb, fan_in, fan_out):
        bound = 1.0 / jnp.sqrt(fan_in)
        w = jax.random.uniform(kw, (fan_in, fan_out), jnp.float32, -bound, bound)
        b = jax.random.uniform(kb, (1, fan_out), jnp.float32, -bound, bound)
        return w, b

    w_pos, b_pos = lin(keys[0], keys[1], dim, 2 * H)          # fc_pos
    w0, b0 = lin(keys[2], keys[3], 2 * H, H)                  # fc_0
    w1, b1 = lin(keys[4], keys[5], 2 * H, H)                  # fc_1
    w2, b2 = lin(keys[6], keys[7], 2 * H, H)                  # fc_2
    w3, b3 = lin(keys[8], keys[9], 2 * H, H)                  # fc_3
    wc, bc = lin(keys[10], keys[11], H, c_dim)                # fc_c

    return {"w_pos": w_pos, "b_pos": b_pos, "w0": w0, "b0": b0,
            "w1": w1, "b1": b1, "w2": w2, "b2": b2, "w3": w3, "b3": b3,
            "wc": wc, "bc": bc}


def reference_forward(p, params, matmul_dtype=jnp.float32, pos_dtype=None):
    """Plain-JAX reference mirroring the PyTorch forward exactly.

    matmul_dtype=jnp.bfloat16 + pos_dtype=jnp.float32 reproduces the kernel's
    MXU input quantization (f32 accumulation everywhere)."""
    if pos_dtype is None:
        pos_dtype = matmul_dtype
    relu = lambda x: jnp.maximum(x, 0.0)

    def mm(x, w, dt):
        return jnp.dot(x.astype(dt), w.astype(dt), preferred_element_type=jnp.float32)

    net = mm(p, params["w_pos"], pos_dtype) + params["b_pos"]
    net = mm(relu(net), params["w0"], matmul_dtype) + params["b0"]
    for i in (1, 2, 3):
        pooled = jnp.max(net, axis=1, keepdims=True)
        pooled = jnp.broadcast_to(pooled, net.shape)
        cat = jnp.concatenate([net, pooled], axis=2)
        net = mm(relu(cat), params[f"w{i}"], matmul_dtype) + params[f"b{i}"]
    net = jnp.max(net, axis=1)
    return mm(relu(net), params["wc"], matmul_dtype) + params["bc"]


if __name__ == "__main__":
    key = jax.random.PRNGKey(0)
    k_p, k_params = jax.random.split(key)

    B, T, D = 16, 16, 3           # batch, number of points, point dimension
    H, C = 32, 32                 # hidden_dim, c_dim (small test sizes)

    p = jax.random.normal(k_p, (B, T, D), jnp.float32)
    params = init_params(k_params, dim=D, hidden_dim=H, c_dim=C)

    out = simple_pointnet_forward(p, params)        # grid=(1,), block_b=B
    out = jax.block_until_ready(out)
    assert out.shape == (B, C)

    # Tight check vs a reference with matched precisions (f32 fc_pos, bf16 rest).
    ref_mixed = reference_forward(p, params, matmul_dtype=jnp.bfloat16,
                                  pos_dtype=jnp.float32)
    assert jnp.allclose(out, ref_mixed, atol=2e-2, rtol=2e-2), "mismatch vs bf16 reference"

    # Loose sanity check vs the exact f32 PyTorch-semantics reference.
    ref_f32 = reference_forward(p, params, matmul_dtype=jnp.float32)
    assert jnp.allclose(out, ref_f32, atol=7e-2, rtol=7e-2), "mismatch vs f32 reference"

    print("KERNEL_OK")
</pallas_src>

<mosaic_0001>
module attributes {stable_mosaic.version = 11 : i64} {
  func.func @simple_pointnet_kernel(%arg0: i32, %arg1: memref<16x16x3xf32, #tpu.memory_space<vmem>>, %arg2: memref<8x128x128xbf16, #tpu.memory_space<vmem>>, %arg3: memref<9x128xf32, #tpu.memory_space<vmem>>, %arg4: memref<16x128xf32, #tpu.memory_space<vmem>>) attributes {dimension_semantics = [#tpu.dimension_semantics<parallel>], iteration_bounds = array<i64: 1>, scalar_prefetch = 0 : i64, scratch_operands = 0 : i64, tpu.core_type = #tpu.core_type<tc>, window_params = [{transform_indices = @transform_0, window_bounds = array<i64: 16, 16, 3>}, {pipeline_mode = #tpu.pipeline_mode<synchronous>, transform_indices = @transform_1, window_bounds = array<i64: 8, 128, 128>}, {pipeline_mode = #tpu.pipeline_mode<synchronous>, transform_indices = @transform_2, window_bounds = array<i64: 9, 128>}, {transform_indices = @transform_3, window_bounds = array<i64: 16, 128>}]} {
    %c0 = arith.constant 0 : index
    %c0_0 = arith.constant 0 : index
    %c0_1 = arith.constant 0 : index
    %0 = vector.load %arg1[%c0, %c0_0, %c0_1] : memref<16x16x3xf32, #tpu.memory_space<vmem>>, vector<16x16x3xf32>
    %1 = vector.shape_cast %0 : vector<16x16x3xf32> to vector<256x3xf32>
    %c0_2 = arith.constant 0 : index
    %c0_3 = arith.constant 0 : index
    %2 = vector.load %arg3[%c0_2, %c0_3] : memref<9x128xf32, #tpu.memory_space<vmem>>, vector<3x128xf32>
    %cst = arith.constant dense<0.000000e+00> : vector<256x128xf32>
    %3 = tpu.matmul %1, %2, %cst {dimension_numbers = #tpu.dot_dimension_numbers<[1], [0], [0], [1], [0, 0, 1, 1], [], []>} : vector<256x3xf32>, vector<3x128xf32>, vector<256x128xf32> -> vector<256x128xf32>
    %c3 = arith.constant 3 : index
    %c0_4 = arith.constant 0 : index
    %4 = vector.load %arg3[%c3, %c0_4] : memref<9x128xf32, #tpu.memory_space<vmem>>, vector<1x128xf32>
    %5 = vector.broadcast %4 : vector<1x128xf32> to vector<256x128xf32>
    %6 = arith.addf %3, %5 : vector<256x128xf32>
    %cst_5 = arith.constant 0.000000e+00 : f32
    %7 = vector.broadcast %cst_5 : f32 to vector<256x128xf32>
    %8 = arith.maximumf %6, %7 : vector<256x128xf32>
    %c0_6 = arith.constant 0 : index
    %c0_7 = arith.constant 0 : index
    %c0_8 = arith.constant 0 : index
    %9 = vector.load %arg2[%c0_6, %c0_7, %c0_8] : memref<8x128x128xbf16, #tpu.memory_space<vmem>>, vector<1x128x128xbf16>
    %10 = vector.shape_cast %9 : vector<1x128x128xbf16> to vector<128x128xbf16>
    %11 = arith.truncf %8 : vector<256x128xf32> to vector<256x128xbf16>
    %cst_9 = arith.constant dense<0.000000e+00> : vector<256x128xf32>
    %12 = tpu.matmul %11, %10, %cst_9 {dimension_numbers = #tpu.dot_dimension_numbers<[1], [0], [0], [1], [0, 0, 1, 1], [], []>} : vector<256x128xbf16>, vector<128x128xbf16>, vector<256x128xf32> -> vector<256x128xf32>
    %c4 = arith.constant 4 : index
    %c0_10 = arith.constant 0 : index
    %13 = vector.load %arg3[%c4, %c0_10] : memref<9x128xf32, #tpu.memory_space<vmem>>, vector<1x128xf32>
    %14 = vector.broadcast %13 : vector<1x128xf32> to vector<256x128xf32>
    %15 = arith.addf %12, %14 : vector<256x128xf32>
    %c1 = arith.constant 1 : index
    %c0_11 = arith.constant 0 : index
    %c0_12 = arith.constant 0 : index
    %16 = vector.load %arg2[%c1, %c0_11, %c0_12] : memref<8x128x128xbf16, #tpu.memory_space<vmem>>, vector<1x128x128xbf16>
    %17 = vector.shape_cast %16 : vector<1x128x128xbf16> to vector<128x128xbf16>
    %c2 = arith.constant 2 : index
    %c0_13 = arith.constant 0 : index
    %c0_14 = arith.constant 0 : index
    %18 = vector.load %arg2[%c2, %c0_13, %c0_14] : memref<8x128x128xbf16, #tpu.memory_space<vmem>>, vector<1x128x128xbf16>
    %19 = vector.shape_cast %18 : vector<1x128x128xbf16> to vector<128x128xbf16>
    %c5 = arith.constant 5 : index
    %c0_15 = arith.constant 0 : index
    %20 = vector.load %arg3[%c5, %c0_15] : memref<9x128xf32, #tpu.memory_space<vmem>>, vector<1x128xf32>
    %cst_16 = arith.constant 0.000000e+00 : f32
    %21 = vector.broadcast %cst_16 : f32 to vector<256x128xf32>
    %22 = arith.maximumf %15, %21 : vector<256x128xf32>
    %23 = vector.shape_cast %22 : vector<256x128xf32> to vector<16x16x128xf32>
    %cst_17 = arith.constant dense<0xFF800000> : vector<16x128xf32>
    %24 = vector.multi_reduction <maximumf>, %23, %cst_17 [0] : vector<16x16x128xf32> to vector<16x128xf32>
    %25 = arith.truncf %22 : vector<256x128xf32> to vector<256x128xbf16>
    %cst_18 = arith.constant dense<0.000000e+00> : vector<256x128xf32>
    %26 = tpu.matmul %25, %17, %cst_18 {dimension_numbers = #tpu.dot_dimension_numbers<[1], [0], [0], [1], [0, 0, 1, 1], [], []>} : vector<256x128xbf16>, vector<128x128xbf16>, vector<256x128xf32> -> vector<256x128xf32>
    %27 = arith.truncf %24 : vector<16x128xf32> to vector<16x128xbf16>
    %cst_19 = arith.constant dense<0.000000e+00> : vector<16x128xf32>
    %28 = tpu.matmul %27, %19, %cst_19 {dimension_numbers = #tpu.dot_dimension_numbers<[1], [0], [0], [1], [0, 0, 1, 1], [], []>} : vector<16x128xbf16>, vector<128x128xbf16>, vector<16x128xf32> -> vector<16x128xf32>
    %29 = vector.broadcast %20 : vector<1x128xf32> to vector<16x128xf32>
    %30 = arith.addf %28, %29 : vector<16x128xf32>
    %31 = vector.shape_cast %26 : vector<256x128xf32> to vector<16x16x128xf32>
    %32 = vector.shape_cast %30 : vector<16x128xf32> to vector<1x16x128xf32>
    %33 = vector.broadcast %32 : vector<1x16x128xf32> to vector<16x16x128xf32>
    %34 = arith.addf %31, %33 : vector<16x16x128xf32>
    %35 = vector.shape_cast %34 : vector<16x16x128xf32> to vector<256x128xf32>
    %c3_20 = arith.constant 3 : index
    %c0_21 = arith.constant 0 : index
    %c0_22 = arith.constant 0 : index
    %36 = vector.load %arg2[%c3_20, %c0_21, %c0_22] : memref<8x128x128xbf16, #tpu.memory_space<vmem>>, vector<1x128x128xbf16>
    %37 = vector.shape_cast %36 : vector<1x128x128xbf16> to vector<128x128xbf16>
    %c4_23 = arith.constant 4 : index
    %c0_24 = arith.constant 0 : index
    %c0_25 = arith.constant 0 : index
    %38 = vector.load %arg2[%c4_23, %c0_24, %c0_25] : memref<8x128x128xbf16, #tpu.memory_space<vmem>>, vector<1x128x128xbf16>
    %39 = vector.shape_cast %38 : vector<1x128x128xbf16> to vector<128x128xbf16>
    %c6 = arith.constant 6 : index
    %c0_26 = arith.constant 0 : index
    %40 = vector.load %arg3[%c6, %c0_26] : memref<9x128xf32, #tpu.memory_space<vmem>>, vector<1x128xf32>
    %cst_27 = arith.constant 0.000000e+00 : f32
    %41 = vector.broadcast %cst_27 : f32 to vector<256x128xf32>
    %42 = arith.maximumf %35, %41 : vector<256x128xf32>
    %43 = vector.shape_cast %42 : vector<256x128xf32> to vector<16x16x128xf32>
    %cst_28 = arith.constant dense<0xFF800000> : vector<16x128xf32>
    %44 = vector.multi_reduction <maximumf>, %43, %cst_28 [0] : vector<16x16x128xf32> to vector<16x128xf32>
    %45 = arith.truncf %42 : vector<256x128xf32> to vector<256x128xbf16>
    %cst_29 = arith.constant dense<0.000000e+00> : vector<256x128xf32>
    %46 = tpu.matmul %45, %37, %cst_29 {dimension_numbers = #tpu.dot_dimension_numbers<[1], [0], [0], [1], [0, 0, 1, 1], [], []>} : vector<256x128xbf16>, vector<128x128xbf16>, vector<256x128xf32> -> vector<256x128xf32>
    %47 = arith.truncf %44 : vector<16x128xf32> to vector<16x128xbf16>
    %cst_30 = arith.constant dense<0.000000e+00> : vector<16x128xf32>
    %48 = tpu.matmul %47, %39, %cst_30 {dimension_numbers = #tpu.dot_dimension_numbers<[1], [0], [0], [1], [0, 0, 1, 1], [], []>} : vector<16x128xbf16>, vector<128x128xbf16>, vector<16x128xf32> -> vector<16x128xf32>
    %49 = vector.broadcast %40 : vector<1x128xf32> to vector<16x128xf32>
    %50 = arith.addf %48, %49 : vector<16x128xf32>
    %51 = vector.shape_cast %46 : vector<256x128xf32> to vector<16x16x128xf32>
    %52 = vector.shape_cast %50 : vector<16x128xf32> to vector<1x16x128xf32>
    %53 = vector.broadcast %52 : vector<1x16x128xf32> to vector<16x16x128xf32>
    %54 = arith.addf %51, %53 : vector<16x16x128xf32>
    %55 = vector.shape_cast %54 : vector<16x16x128xf32> to vector<256x128xf32>
    %c5_31 = arith.constant 5 : index
    %c0_32 = arith.constant 0 : index
    %c0_33 = arith.constant 0 : index
    %56 = vector.load %arg2[%c5_31, %c0_32, %c0_33] : memref<8x128x128xbf16, #tpu.memory_space<vmem>>, vector<1x128x128xbf16>
    %57 = vector.shape_cast %56 : vector<1x128x128xbf16> to vector<128x128xbf16>
    %c6_34 = arith.constant 6 : index
    %c0_35 = arith.constant 0 : index
    %c0_36 = arith.constant 0 : index
    %58 = vector.load %arg2[%c6_34, %c0_35, %c0_36] : memref<8x128x128xbf16, #tpu.memory_space<vmem>>, vector<1x128x128xbf16>
    %59 = vector.shape_cast %58 : vector<1x128x128xbf16> to vector<128x128xbf16>
    %c7 = arith.constant 7 : index
    %c0_37 = arith.constant 0 : index
    %60 = vector.load %arg3[%c7, %c0_37] : memref<9x128xf32, #tpu.memory_space<vmem>>, vector<1x128xf32>
    %cst_38 = arith.constant 0.000000e+00 : f32
    %61 = vector.broadcast %cst_38 : f32 to vector<256x128xf32>
    %62 = arith.maximumf %55, %61 : vector<256x128xf32>
    %63 = vector.shape_cast %62 : vector<256x128xf32> to vector<16x16x128xf32>
    %cst_39 = arith.constant dense<0xFF800000> : vector<16x128xf32>
    %64 = vector.multi_reduction <maximumf>, %63, %cst_39 [0] : vector<16x16x128xf32> to vector<16x128xf32>
    %65 = arith.truncf %62 : vector<256x128xf32> to vector<256x128xbf16>
    %cst_40 = arith.constant dense<0.000000e+00> : vector<256x128xf32>
    %66 = tpu.matmul %65, %57, %cst_40 {dimension_numbers = #tpu.dot_dimension_numbers<[1], [0], [0], [1], [0, 0, 1, 1], [], []>} : vector<256x128xbf16>, vector<128x128xbf16>, vector<256x128xf32> -> vector<256x128xf32>
    %67 = arith.truncf %64 : vector<16x128xf32> to vector<16x128xbf16>
    %cst_41 = arith.constant dense<0.000000e+00> : vector<16x128xf32>
    %68 = tpu.matmul %67, %59, %cst_41 {dimension_numbers = #tpu.dot_dimension_numbers<[1], [0], [0], [1], [0, 0, 1, 1], [], []>} : vector<16x128xbf16>, vector<128x128xbf16>, vector<16x128xf32> -> vector<16x128xf32>
    %69 = vector.broadcast %60 : vector<1x128xf32> to vector<16x128xf32>
    %70 = arith.addf %68, %69 : vector<16x128xf32>
    %71 = vector.shape_cast %66 : vector<256x128xf32> to vector<16x16x128xf32>
    %72 = vector.shape_cast %70 : vector<16x128xf32> to vector<1x16x128xf32>
    %73 = vector.broadcast %72 : vector<1x16x128xf32> to vector<16x16x128xf32>
    %74 = arith.addf %71, %73 : vector<16x16x128xf32>
    %75 = vector.shape_cast %74 : vector<16x16x128xf32> to vector<256x128xf32>
    %cst_42 = arith.constant 0.000000e+00 : f32
    %76 = vector.broadcast %cst_42 : f32 to vector<256x128xf32>
    %77 = arith.maximumf %75, %76 : vector<256x128xf32>
    %78 = vector.shape_cast %77 : vector<256x128xf32> to vector<16x16x128xf32>
    %cst_43 = arith.constant dense<0xFF800000> : vector<16x128xf32>
    %79 = vector.multi_reduction <maximumf>, %78, %cst_43 [0] : vector<16x16x128xf32> to vector<16x128xf32>
    %c7_44 = arith.constant 7 : index
    %c0_45 = arith.constant 0 : index
    %c0_46 = arith.constant 0 : index
    %80 = vector.load %arg2[%c7_44, %c0_45, %c0_46] : memref<8x128x128xbf16, #tpu.memory_space<vmem>>, vector<1x128x128xbf16>
    %81 = vector.shape_cast %80 : vector<1x128x128xbf16> to vector<128x128xbf16>
    %82 = arith.truncf %79 : vector<16x128xf32> to vector<16x128xbf16>
    %cst_47 = arith.constant dense<0.000000e+00> : vector<16x128xf32>
    %83 = tpu.matmul %82, %81, %cst_47 {dimension_numbers = #tpu.dot_dimension_numbers<[1], [0], [0], [1], [0, 0, 1, 1], [], []>} : vector<16x128xbf16>, vector<128x128xbf16>, vector<16x128xf32> -> vector<16x128xf32>
    %c8 = arith.constant 8 : index
    %c0_48 = arith.constant 0 : index
    %84 = vector.load %arg3[%c8, %c0_48] : memref<9x128xf32, #tpu.memory_space<vmem>>, vector<1x128xf32>
    %85 = vector.broadcast %84 : vector<1x128xf32> to vector<16x128xf32>
    %86 = arith.addf %83, %85 : vector<16x128xf32>
    %c0_49 = arith.constant 0 : index
    %c0_50 = arith.constant 0 : index
    %87 = vector.load %arg4[%c0_49, %c0_50] : memref<16x128xf32, #tpu.memory_space<vmem>>, vector<16x128xf32>
    tpu.vector_store %arg4[%c0_49, %c0_50], %86 {strides = array<i32>} : memref<16x128xf32, #tpu.memory_space<vmem>>, vector<16x128xf32>,
    return
  }
  func.func @transform_0(%arg0: i32) -> (i32, i32, i32) {
    %c0_i32 = arith.constant 0 : i32
    %c0_i32_0 = arith.constant 0 : i32
    %c0_i32_1 = arith.constant 0 : i32
    return %c0_i32, %arg0, %c0_i32_0 : i32, i32, i32
  }
  func.func @transform_1(%arg0: i32) -> (i32, i32, i32) {
    %c0_i32 = arith.constant 0 : i32
    %c0_i32_0 = arith.constant 0 : i32
    %c0_i32_1 = arith.constant 0 : i32
    %c0_i32_2 = arith.constant 0 : i32
    return %c0_i32, %c0_i32_0, %c0_i32_1 : i32, i32, i32
  }
  func.func @transform_2(%arg0: i32) -> (i32, i32) {
    %c0_i32 = arith.constant 0 : i32
    %c0_i32_0 = arith.constant 0 : i32
    %c0_i32_1 = arith.constant 0 : i32
    return %c0_i32, %c0_i32_0 : i32, i32
  }
  func.func @transform_3(%arg0: i32) -> (i32, i32) {
    %c0_i32 = arith.constant 0 : i32
    %c0_i32_0 = arith.constant 0 : i32
    return %arg0, %c0_i32 : i32, i32
  }
}

</mosaic_0001>

<llo_original>
// kernel: tpu_custom_call.1
$region0: #{tpu_custom_call.1}
  #allocation0 [shape = 'u32[]', space=smem, size = 0x4, offset = 0x4, fixed_abs, tag = 'smem constant byte address 0x4 - core index']
  #allocation1 [shape = 'u32[144,128]{1,0:T(1,128)}', space=vmem, size = 0x12000, scoped, tag = 'internal scratch']
  %s0 = inlined_call_operand.vmem [shape: f32[16,16,3], index: 0, kind: input, shape index: {}]
  %s1 = inlined_call_operand.hbm [shape: bf16[8,128,128], index: 1, kind: input, shape index: {}]
  %s2 = inlined_call_operand.vmem [shape: f32[9,128], index: 2, kind: input, shape index: {}]
  %s3 = inlined_call_operand.hbm [shape: f32[16,128], index: 3, kind: output, shape index: {}]
  %s4 = sld [smem:[#allocation0]]
  $region26: #{tpu_custom_call.1} parent=0
    _
  %s6 = ssub.s32 1, %s4
  %s7 = scalar_select 0, %s6, %s4
  $region1: #{tpu_custom_call.1} parent=0
    #allocation2 [shape = 'u8[262144]{0}', space=vmem, size = 0x40000, scoped, tag = 'input window, operand 1, single buffered']
    #allocation3 [shape = 's32[1]{0}', space=sflag, size = 0x4, scoped, tag = 'scoped memory for tpu_custom_call.1']
    #allocation4 [shape = 's32[1]{0}', space=sflag, size = 0x4, scoped, tag = 'scoped memory for tpu_custom_call.1']
    #allocation5 [shape = 'u8[8192]{0}', space=vmem, size = 0x2000, scoped, tag = 'output window, operand 0, single buffered']
    %8 = vsyncpa [#allocation3], 0
    %9 = vsyncpa [#allocation4], 0
    // Predicated region
    $region2: #{tpu_custom_call.1} parent=1 // pred_check
      _
    $region3: #{tpu_custom_call.1} parent=1 // pred_check_branch
      %11 = sbr.rel (0) target = $region5
    $region4: #{tpu_custom_call.1} parent=1 // pred_region
      _
    $region5: #{tpu_custom_call.1} parent=1 // pred_fallthru
      _
    // Predicated region
    $region6: #{tpu_custom_call.1} parent=1 // pred_check
      _
    $region7: #{tpu_custom_call.1} parent=1 // pred_check_branch
      %13 = sbr.rel (0) target = $region9
    $region8: #{tpu_custom_call.1} parent=1 // pred_region
      %s15 = ssub.s32 8192, 8192
      %16 = vsyncadd [#allocation3], %s15
      %s17 = sshll.u32 [#allocation2], 4
      %s18 = int_to_ptr.vmem [resolvable:$true] %s17
      %23 = dma.hbm_to_vmem [thread:$0]  %s1, 8192, %s18, [#allocation3], 64, 64, 4
    $region9: #{tpu_custom_call.1} parent=1 // pred_fallthru
      _
    // Predicated region
    $region10: #{tpu_custom_call.1} parent=1 // pred_check
      _
    $region11: #{tpu_custom_call.1} parent=1 // pred_check_branch
      %25 = sbr.rel (0) target = $region13
    $region12: #{tpu_custom_call.1} parent=1 // pred_region
      _
    $region13: #{tpu_custom_call.1} parent=1 // pred_fallthru
      _
    // Predicated region
    $region14: #{tpu_custom_call.1} parent=1 // pred_check
      _
    $region15: #{tpu_custom_call.1} parent=1 // pred_check_branch
      %27 = sbr.rel (0) target = $region17
    $region16: #{tpu_custom_call.1} parent=1 // pred_region
      %28 = dma.done [#allocation3], 8192
    $region17: #{tpu_custom_call.1} parent=1 // pred_fallthru
      _
    %v30 = vld [vmem:[%s0] sm:$0xff]
    %v31 = vld [vmem:[%s0 + $0x8] sm:$0xff]
    %v32 = vld [vmem:[%s0 + $0x10] sm:$0xff]
    %v33 = vld [vmem:[%s0 + $0x18] sm:$0xff]
    %v34 = vld [vmem:[%s0 + $0x20] sm:$0xff]
    %v35 = vld [vmem:[%s0 + $0x28] sm:$0xff]
    %v36 = vld [vmem:[%s0 + $0x30] sm:$0xff]
    %v37 = vld [vmem:[%s0 + $0x38] sm:$0xff]
    %v38 = vld [vmem:[%s0 + $0x40] sm:$0xff]
    %v39 = vld [vmem:[%s0 + $0x48] sm:$0xff]
    %v40 = vld [vmem:[%s0 + $0x50] sm:$0xff]
    %v41 = vld [vmem:[%s0 + $0x58] sm:$0xff]
    %v42 = vld [vmem:[%s0 + $0x60] sm:$0xff]
    %v43 = vld [vmem:[%s0 + $0x68] sm:$0xff]
    %v44 = vld [vmem:[%s0 + $0x70] sm:$0xff]
    %v45 = vld [vmem:[%s0 + $0x78] sm:$0xff]
    %v46 = vld [vmem:[%s0 + $0x80] sm:$0xff]
    %v47 = vld [vmem:[%s0 + $0x88] sm:$0xff]
    %v48 = vld [vmem:[%s0 + $0x90] sm:$0xff]
    %v49 = vld [vmem:[%s0 + $0x98] sm:$0xff]
    %v50 = vld [vmem:[%s0 + $0xa0] sm:$0xff]
    %v51 = vld [vmem:[%s0 + $0xa8] sm:$0xff]
    %v52 = vld [vmem:[%s0 + $0xb0] sm:$0xff]
    %v53 = vld [vmem:[%s0 + $0xb8] sm:$0xff]
    %v54 = vld [vmem:[%s0 + $0xc0] sm:$0xff]
    %v55 = vld [vmem:[%s0 + $0xc8] sm:$0xff]
    %v56 = vld [vmem:[%s0 + $0xd0] sm:$0xff]
    %v57 = vld [vmem:[%s0 + $0xd8] sm:$0xff]
    %v58 = vld [vmem:[%s0 + $0xe0] sm:$0xff]
    %v59 = vld [vmem:[%s0 + $0xe8] sm:$0xff]
    %v60 = vld [vmem:[%s0 + $0xf0] sm:$0xff]
    %v61 = vld [vmem:[%s0 + $0xf8] sm:$0xff]
    %v62 = vld [vmem:[%s2] sm:$0x7]
    %v63 = vld [vmem:[%s2 + $0x3] sm:$0x1]
    %v64 = vlaneseq
    %v65 = vshrl.u32 %v64, 7
    %v66 = vsub.s32 0, %v65
    %v67 = vrot.slane %v63, %v66
    %vm68 = vcmask 23552
    %v70 = vsel %vm68, %v30, 0
    %v73 = vsel %vm68, %v31, 0
    %v76 = vsel %vm68, %v32, 0
    %v79 = vsel %vm68, %v33, 0
    %v82 = vsel %vm68, %v34, 0
    %v85 = vsel %vm68, %v35, 0
    %v88 = vsel %vm68, %v36, 0
    %v91 = vsel %vm68, %v37, 0
    %v94 = vsel %vm68, %v38, 0
    %v97 = vsel %vm68, %v39, 0
    %v100 = vsel %vm68, %v40, 0
    %v103 = vsel %vm68, %v41, 0
    %v106 = vsel %vm68, %v42, 0
    %v109 = vsel %vm68, %v43, 0
    %v112 = vsel %vm68, %v44, 0
    %v115 = vsel %vm68, %v45, 0
    %v118 = vsel %vm68, %v46, 0
    %v121 = vsel %vm68, %v47, 0
    %v124 = vsel %vm68, %v48, 0
    %v127 = vsel %vm68, %v49, 0
    %v130 = vsel %vm68, %v50, 0
    %v133 = vsel %vm68, %v51, 0
    %v136 = vsel %vm68, %v52, 0
    %v139 = vsel %vm68, %v53, 0
    %v142 = vsel %vm68, %v54, 0
    %v145 = vsel %vm68, %v55, 0
    %v148 = vsel %vm68, %v56, 0
    %v151 = vsel %vm68, %v57, 0
    %v154 = vsel %vm68, %v58, 0
    %v157 = vsel %vm68, %v59, 0
    %v160 = vsel %vm68, %v60, 0
    %v163 = vsel %vm68, %v61, 0
    %vm165 = vcmask 1042432
    %v167 = vsel %vm165, %v62, 0
    %169 = vmatprep.subr.mxu0 0.0
    %170 = vmatpush1.msra.mxu0 0.0
    %171 = vmatprep.subr.mxu0 0.0
    %172 = vmatpush1.msra.mxu0 0.0
    %173 = vmatprep.subr.mxu0 0.0
    %174 = vmatpush1.msra.mxu0 0.0
    %175 = vmatprep.subr.mxu0 0.0
    %176 = vmatpush1.msra.mxu0 0.0
    %177 = vmatprep.subr.mxu0 0.0
    %178 = vmatpush1.msra.mxu0 0.0
    %179 = vmatprep.subr.mxu0 0.0
    %180 = vmatpush1.msra.mxu0 0.0
    %181 = vmatprep.subr.mxu0 0.0
    %182 = vmatpush1.msra.mxu0 0.0
    %183 = vmatprep.subr.mxu0 0.0
    %184 = vmatpush1.msra.mxu0 0.0
    %185 = vmatprep.subr.mxu0 0.0
    %186 = vmatpush1.msra.mxu0 0.0
    %187 = vmatprep.subr.mxu0 0.0
    %188 = vmatpush1.msra.mxu0 0.0
    %189 = vmatprep.subr.mxu0 0.0
    %190 = vmatpush1.msra.mxu0 0.0
    %191 = vmatprep.subr.mxu0 0.0
    %192 = vmatpush1.msra.mxu0 0.0
    %193 = vmatprep.subr.mxu0 0.0
    %194 = vmatpush1.msra.mxu0 0.0
    %195 = vmatprep.subr.mxu0 0.0
    %196 = vmatpush1.msra.mxu0 0.0
    %197 = vmatprep.subr.mxu0 0.0
    %198 = vmatpush1.msra.mxu0 0.0
    %199 = vmatprep.subr.mxu0 0.0
    %200 = vmatpush1.msra.mxu0 %v167
    %201 = vmatprep.subr.mxu0 0.0
    %202 = vmatpush2.msra.mxu0 0.0
    %203 = vmatprep.subr.mxu0 0.0
    %204 = vmatpush2.msra.mxu0 0.0
    %205 = vmatprep.subr.mxu0 0.0
    %206 = vmatpush2.msra.mxu0 0.0
    %207 = vmatprep.subr.mxu0 0.0
    %208 = vmatpush2.msra.mxu0 0.0
    %209 = vmatprep.subr.mxu0 0.0
    %210 = vmatpush2.msra.mxu0 0.0
    %211 = vmatprep.subr.mxu0 0.0
    %212 = vmatpush2.msra.mxu0 0.0
    %213 = vmatprep.subr.mxu0 0.0
    %214 = vmatpush2.msra.mxu0 0.0
    %215 = vmatprep.subr.mxu0 0.0
    %216 = vmatpush2.msra.mxu0 0.0
    %217 = vmatprep.subr.mxu0 0.0
    %218 = vmatpush2.msra.mxu0 0.0
    %219 = vmatprep.subr.mxu0 0.0
    %220 = vmatpush2.msra.mxu0 0.0
    %221 = vmatprep.subr.mxu0 0.0
    %222 = vmatpush2.msra.mxu0 0.0
    %223 = vmatprep.subr.mxu0 0.0
    %224 = vmatpush2.msra.mxu0 0.0
    %225 = vmatprep.subr.mxu0 0.0
    %226 = vmatpush2.msra.mxu0 0.0
    %227 = vmatprep.subr.mxu0 0.0
    %228 = vmatpush2.msra.mxu0 0.0
    %229 = vmatprep.subr.mxu0 0.0
    %230 = vmatpush2.msra.mxu0 0.0
    %231 = vmatprep.subr.mxu0 0.0
    %232 = vmatpush2.msra.mxu0 0.0
    %233 = vmatprep.mubr.f32.mxu0 0.0
    %234 = vmatmul.mubr.f32.gmra.mxu0 %v70
    %v235 = vpop.f32.mrf.mxu0
    %v236 = vadd.f32 %v67, %v235
    %v237 = vpop.f32.mrf.mxu0
    %238 = vmatprep.mubr.f32.mxu0 0.0
    %239 = vmatmul.mubr.f32.gmra.mxu0 %v73
    %v240 = vpop.f32.mrf.mxu0
    %v241 = vadd.f32 %v67, %v240
    %v242 = vpop.f32.mrf.mxu0
    %243 = vmatprep.mubr.f32.mxu0 0.0
    %244 = vmatmul.mubr.f32.gmra.mxu0 %v76
    %v245 = vpop.f32.mrf.mxu0
    %v246 = vadd.f32 %v67, %v245
    %v247 = vpop.f32.mrf.mxu0
    %248 = vmatprep.mubr.f32.mxu0 0.0
    %249 = vmatmul.mubr.f32.gmra.mxu0 %v79
    %v250 = vpop.f32.mrf.mxu0
    %v251 = vadd.f32 %v67, %v250
    %v252 = vpop.f32.mrf.mxu0
    %253 = vmatprep.mubr.f32.mxu0 0.0
    %254 = vmatmul.mubr.f32.gmra.mxu0 %v82
    %v255 = vpop.f32.mrf.mxu0
    %v256 = vadd.f32 %v67, %v255
    %v257 = vpop.f32.mrf.mxu0
    %258 = vmatprep.mubr.f32.mxu0 0.0
    %259 = vmatmul.mubr.f32.gmra.mxu0 %v85
    %v260 = vpop.f32.mrf.mxu0
    %v261 = vadd.f32 %v67, %v260
    %v262 = vpop.f32.mrf.mxu0
    %263 = vmatprep.mubr.f32.mxu0 0.0
    %264 = vmatmul.mubr.f32.gmra.mxu0 %v88
    %v265 = vpop.f32.mrf.mxu0
    %v266 = vadd.f32 %v67, %v265
    %v267 = vpop.f32.mrf.mxu0
    %268 = vmatprep.mubr.f32.mxu0 0.0
    %269 = vmatmul.mubr.f32.gmra.mxu0 %v91
    %v270 = vpop.f32.mrf.mxu0
    %v271 = vadd.f32 %v67, %v270
    %v272 = vpop.f32.mrf.mxu0
    %273 = vmatprep.mubr.f32.mxu0 0.0
    %274 = vmatmul.mubr.f32.gmra.mxu0 %v94
    %v275 = vpop.f32.mrf.mxu0
    %v276 = vadd.f32 %v67, %v275
    %v277 = vpop.f32.mrf.mxu0
    %278 = vmatprep.mubr.f32.mxu0 0.0
    %279 = vmatmul.mubr.f32.gmra.mxu0 %v97
    %v280 = vpop.f32.mrf.mxu0
    %v281 = vadd.f32 %v67, %v280
    %v282 = vpop.f32.mrf.mxu0
    %283 = vmatprep.mubr.f32.mxu0 0.0
    %284 = vmatmul.mubr.f32.gmra.mxu0 %v100
    %v285 = vpop.f32.mrf.mxu0
    %v286 = vadd.f32 %v67, %v285
    %v287 = vpop.f32.mrf.mxu0
    %288 = vmatprep.mubr.f32.mxu0 0.0
    %289 = vmatmul.mubr.f32.gmra.mxu0 %v103
    %v290 = vpop.f32.mrf.mxu0
    %v291 = vadd.f32 %v67, %v290
    %v292 = vpop.f32.mrf.mxu0
    %293 = vmatprep.mubr.f32.mxu0 0.0
    %294 = vmatmul.mubr.f32.gmra.mxu0 %v106
    %v295 = vpop.f32.mrf.mxu0
    %v296 = vadd.f32 %v67, %v295
    %v297 = vpop.f32.mrf.mxu0
    %298 = vmatprep.mubr.f32.mxu0 0.0
    %299 = vmatmul.mubr.f32.gmra.mxu0 %v109
    %v300 = vpop.f32.mrf.mxu0
    %v301 = vadd.f32 %v67, %v300
    %v302 = vpop.f32.mrf.mxu0
    %303 = vmatprep.mubr.f32.mxu0 0.0
    %304 = vmatmul.mubr.f32.gmra.mxu0 %v112
    %v305 = vpop.f32.mrf.mxu0
    %v306 = vadd.f32 %v67, %v305
    %v307 = vpop.f32.mrf.mxu0
    %308 = vmatprep.mubr.f32.mxu0 0.0
    %309 = vmatmul.mubr.f32.gmra.mxu0 %v115
    %v310 = vpop.f32.mrf.mxu0
    %v311 = vadd.f32 %v67, %v310
    %v312 = vpop.f32.mrf.mxu0
    %313 = vmatprep.mubr.f32.mxu0 0.0
    %314 = vmatmul.mubr.f32.gmra.mxu0 %v118
    %v315 = vpop.f32.mrf.mxu0
    %v316 = vadd.f32 %v67, %v315
    %v317 = vpop.f32.mrf.mxu0
    %318 = vmatprep.mubr.f32.mxu0 0.0
    %319 = vmatmul.mubr.f32.gmra.mxu0 %v121
    %v320 = vpop.f32.mrf.mxu0
    %v321 = vadd.f32 %v67, %v320
    %v322 = vpop.f32.mrf.mxu0
    %323 = vmatprep.mubr.f32.mxu0 0.0
    %324 = vmatmul.mubr.f32.gmra.mxu0 %v124
    %v325 = vpop.f32.mrf.mxu0
    %v326 = vadd.f32 %v67, %v325
    %v327 = vpop.f32.mrf.mxu0
    %328 = vmatprep.mubr.f32.mxu0 0.0
    %329 = vmatmul.mubr.f32.gmra.mxu0 %v127
    %v330 = vpop.f32.mrf.mxu0
    %v331 = vadd.f32 %v67, %v330
    %v332 = vpop.f32.mrf.mxu0
    %333 = vmatprep.mubr.f32.mxu0 0.0
    %334 = vmatmul.mubr.f32.gmra.mxu0 %v130
    %v335 = vpop.f32.mrf.mxu0
    %v336 = vadd.f32 %v67, %v335
    %v337 = vpop.f32.mrf.mxu0
    %338 = vmatprep.mubr.f32.mxu0 0.0
    %339 = vmatmul.mubr.f32.gmra.mxu0 %v133
    %v340 = vpop.f32.mrf.mxu0
    %v341 = vadd.f32 %v67, %v340
    %v342 = vpop.f32.mrf.mxu0
    %343 = vmatprep.mubr.f32.mxu0 0.0
    %344 = vmatmul.mubr.f32.gmra.mxu0 %v136
    %v345 = vpop.f32.mrf.mxu0
    %v346 = vadd.f32 %v67, %v345
    %v347 = vpop.f32.mrf.mxu0
    %348 = vmatprep.mubr.f32.mxu0 0.0
    %349 = vmatmul.mubr.f32.gmra.mxu0 %v139
    %v350 = vpop.f32.mrf.mxu0
    %v351 = vadd.f32 %v67, %v350
    %v352 = vpop.f32.mrf.mxu0
    %353 = vmatprep.mubr.f32.mxu0 0.0
    %354 = vmatmul.mubr.f32.gmra.mxu0 %v142
    %v355 = vpop.f32.mrf.mxu0
    %v356 = vadd.f32 %v67, %v355
    %v357 = vpop.f32.mrf.mxu0
    %358 = vmatprep.mubr.f32.mxu0 0.0
    %359 = vmatmul.mubr.f32.gmra.mxu0 %v145
    %v360 = vpop.f32.mrf.mxu0
    %v361 = vadd.f32 %v67, %v360
    %v362 = vpop.f32.mrf.mxu0
    %363 = vmatprep.mubr.f32.mxu0 0.0
    %364 = vmatmul.mubr.f32.gmra.mxu0 %v148
    %v365 = vpop.f32.mrf.mxu0
    %v366 = vadd.f32 %v67, %v365
    %v367 = vpop.f32.mrf.mxu0
    %368 = vmatprep.mubr.f32.mxu0 0.0
    %369 = vmatmul.mubr.f32.gmra.mxu0 %v151
    %v370 = vpop.f32.mrf.mxu0
    %v371 = vadd.f32 %v67, %v370
    %v372 = vpop.f32.mrf.mxu0
    %373 = vmatprep.mubr.f32.mxu0 0.0
    %374 = vmatmul.mubr.f32.gmra.mxu0 %v154
    %v375 = vpop.f32.mrf.mxu0
    %v376 = vadd.f32 %v67, %v375
    %v377 = vpop.f32.mrf.mxu0
    %378 = vmatprep.mubr.f32.mxu0 0.0
    %379 = vmatmul.mubr.f32.gmra.mxu0 %v157
    %v380 = vpop.f32.mrf.mxu0
    %v381 = vadd.f32 %v67, %v380
    %v382 = vpop.f32.mrf.mxu0
    %383 = vmatprep.mubr.f32.mxu0 0.0
    %384 = vmatmul.mubr.f32.gmra.mxu0 %v160
    %v385 = vpop.f32.mrf.mxu0
    %v386 = vadd.f32 %v67, %v385
    %v387 = vpop.f32.mrf.mxu0
    %388 = vmatprep.mubr.f32.mxu0 0.0
    %389 = vmatmul.mubr.f32.gmra.mxu0 %v163
    %v390 = vpop.f32.mrf.mxu0
    %v391 = vadd.f32 %v67, %v390
    %v392 = vpop.f32.mrf.mxu0
    %393 = vdwg.mxu0
    %v394 = vmax.f32 %v236, 0.0
    %v395 = vmax.f32 %v241, 0.0
    %v396 = vmax.f32 %v246, 0.0
    %v397 = vmax.f32 %v251, 0.0
    %v398 = vmax.f32 %v256, 0.0
    %v399 = vmax.f32 %v261, 0.0
    %v400 = vmax.f32 %v266, 0.0
    %v401 = vmax.f32 %v271, 0.0
    %v402 = vmax.f32 %v276, 0.0
    %v403 = vmax.f32 %v281, 0.0
    %v404 = vmax.f32 %v286, 0.0
    %v405 = vmax.f32 %v291, 0.0
    %v406 = vmax.f32 %v296, 0.0
    %v407 = vmax.f32 %v301, 0.0
    %v408 = vmax.f32 %v306, 0.0
    %v409 = vmax.f32 %v311, 0.0
    %v410 = vmax.f32 %v316, 0.0
    %v411 = vmax.f32 %v321, 0.0
    %v412 = vmax.f32 %v326, 0.0
    %v413 = vmax.f32 %v331, 0.0
    %v414 = vmax.f32 %v336, 0.0
    %v415 = vmax.f32 %v341, 0.0
    %v416 = vmax.f32 %v346, 0.0
    %v417 = vmax.f32 %v351, 0.0
    %v418 = vmax.f32 %v356, 0.0
    %v419 = vmax.f32 %v361, 0.0
    %v420 = vmax.f32 %v366, 0.0
    %v421 = vmax.f32 %v371, 0.0
    %v422 = vmax.f32 %v376, 0.0
    %v423 = vmax.f32 %v381, 0.0
    %v424 = vmax.f32 %v386, 0.0
    %v425 = vmax.f32 %v391, 0.0
    %v426 = vld [vmem:[#allocation2] sm:$0xf]
    %v427 = vld [vmem:[#allocation2 + $0x4] sm:$0xf]
    %v428 = vld [vmem:[#allocation2 + $0x8] sm:$0xf]
    %v429 = vld [vmem:[#allocation2 + $0xc] sm:$0xf]
    %v430 = vld [vmem:[#allocation2 + $0x10] sm:$0xf]
    %v431 = vld [vmem:[#allocation2 + $0x14] sm:$0xf]
    %v432 = vld [vmem:[#allocation2 + $0x18] sm:$0xf]
    %v433 = vld [vmem:[#allocation2 + $0x1c] sm:$0xf]
    %v434 = vld [vmem:[#allocation2 + $0x20] sm:$0xf]
    %v435 = vld [vmem:[#allocation2 + $0x24] sm:$0xf]
    %v436 = vld [vmem:[#allocation2 + $0x28] sm:$0xf]
    %v437 = vld [vmem:[#allocation2 + $0x2c] sm:$0xf]
    %v438 = vld [vmem:[#allocation2 + $0x30] sm:$0xf]
    %v439 = vld [vmem:[#allocation2 + $0x34] sm:$0xf]
    %v440 = vld [vmem:[#allocation2 + $0x38] sm:$0xf]
    %v441 = vld [vmem:[#allocation2 + $0x3c] sm:$0xf]
    %v442 = vpack.c.bf16 %v395, %v394
    %v443 = vpack.c.bf16 %v397, %v396
    %v444 = vpack.c.bf16 %v399, %v398
    %v445 = vpack.c.bf16 %v401, %v400
    %v446 = vpack.c.bf16 %v403, %v402
    %v447 = vpack.c.bf16 %v405, %v404
    %v448 = vpack.c.bf16 %v407, %v406
    %v449 = vpack.c.bf16 %v409, %v408
    %v450 = vpack.c.bf16 %v411, %v410
    %v451 = vpack.c.bf16 %v413, %v412
    %v452 = vpack.c.bf16 %v415, %v414
    %v453 = vpack.c.bf16 %v417, %v416
    %v454 = vpack.c.bf16 %v419, %v418
    %v455 = vpack.c.bf16 %v421, %v420
    %v456 = vpack.c.bf16 %v423, %v422
    %v457 = vpack.c.bf16 %v425, %v424
    %v458 = vld [vmem:[%s2 + $0x4] sm:$0x1]
    %v459 = vlaneseq
    %v460 = vshrl.u32 %v459, 7
    %v461 = vsub.s32 0, %v460
    %v462 = vrot.slane %v458, %v461
    %v479 = vunpack.c.l.b16 %v426
    %v480 = vunpack.c.l.b16 %v427
    %v481 = vunpack.c.l.b16 %v428
    %v482 = vunpack.c.l.b16 %v429
    %v483 = vunpack.c.l.b16 %v430
    %v484 = vunpack.c.l.b16 %v431
    %v485 = vunpack.c.l.b16 %v432
    %v486 = vunpack.c.l.b16 %v433
    %v487 = vunpack.c.l.b16 %v434
    %v488 = vunpack.c.l.b16 %v435
    %v489 = vunpack.c.l.b16 %v436
    %v490 = vunpack.c.l.b16 %v437
    %v491 = vunpack.c.l.b16 %v438
    %v492 = vunpack.c.l.b16 %v439
    %v493 = vunpack.c.l.b16 %v440
    %v494 = vunpack.c.l.b16 %v441
    %v495 = vpack.c.b16 %v480, %v479
    %v496 = vpack.c.b16 %v482, %v481
    %v497 = vpack.c.b16 %v484, %v483
    %v498 = vpack.c.b16 %v486, %v485
    %v499 = vpack.c.b16 %v488, %v487
    %v500 = vpack.c.b16 %v490, %v489
    %v501 = vpack.c.b16 %v492, %v491
    %v502 = vpack.c.b16 %v494, %v493
    %511 = vmatprep.subr.bf16.mxu0 0
    %512 = vmatpush1.bf16.msra.mxu0 %v502
    %513 = vmatprep.subr.bf16.mxu0 0
    %514 = vmatpush1.bf16.msra.mxu0 %v501
    %515 = vmatprep.subr.bf16.mxu0 0
    %516 = vmatpush1.bf16.msra.mxu0 %v500
    %517 = vmatprep.subr.bf16.mxu0 0
    %518 = vmatpush1.bf16.msra.mxu0 %v499
    %519 = vmatprep.subr.bf16.mxu0 0
    %520 = vmatpush1.bf16.msra.mxu0 %v498
    %521 = vmatprep.subr.bf16.mxu0 0
    %522 = vmatpush1.bf16.msra.mxu0 %v497
    %523 = vmatprep.subr.bf16.mxu0 0
    %524 = vmatpush1.bf16.msra.mxu0 %v496
    %525 = vmatprep.subr.bf16.mxu0 0
    %526 = vmatpush1.bf16.msra.mxu0 %v495
    %527 = vmatprep.subr.bf16.mxu0 0
    %528 = vmatpush2.bf16.msra.mxu0 0
    %529 = vmatprep.subr.bf16.mxu0 0
    %530 = vmatpush2.bf16.msra.mxu0 0
    %531 = vmatprep.subr.bf16.mxu0 0
    %532 = vmatpush2.bf16.msra.mxu0 0
    %533 = vmatprep.subr.bf16.mxu0 0
    %534 = vmatpush2.bf16.msra.mxu0 0
    %535 = vmatprep.subr.bf16.mxu0 0
    %536 = vmatpush2.bf16.msra.mxu0 0
    %537 = vmatprep.subr.bf16.mxu0 0
    %538 = vmatpush2.bf16.msra.mxu0 0
    %539 = vmatprep.subr.bf16.mxu0 0
    %540 = vmatpush2.bf16.msra.mxu0 0
    %541 = vmatprep.subr.bf16.mxu0 0
    %542 = vmatpush2.bf16.msra.mxu0 0
    %543 = vmatprep.mubr.bf16.mxu0 0
    %544 = vmatmul.mubr.bf16.gmra.mxu0 %v442
    %v545 = vpop.f32.mrf.mxu0
    %v546 = vadd.f32 %v462, %v545
    %v547 = vpop.f32.mrf.mxu0
    %v548 = vpop.f32.mrf.mxu0
    %v549 = vadd.f32 %v462, %v548
    %v550 = vpop.f32.mrf.mxu0
    %551 = vmatprep.mubr.bf16.mxu0 0
    %552 = vmatmul.mubr.bf16.gmra.mxu0 %v443
    %v553 = vpop.f32.mrf.mxu0
    %v554 = vadd.f32 %v462, %v553
    %v555 = vpop.f32.mrf.mxu0
    %v556 = vpop.f32.mrf.mxu0
    %v557 = vadd.f32 %v462, %v556
    %v558 = vpop.f32.mrf.mxu0
    %559 = vmatprep.mubr.bf16.mxu0 0
    %560 = vmatmul.mubr.bf16.gmra.mxu0 %v444
    %v561 = vpop.f32.mrf.mxu0
    %v562 = vadd.f32 %v462, %v561
    %v563 = vpop.f32.mrf.mxu0
    %v564 = vpop.f32.mrf.mxu0
    %v565 = vadd.f32 %v462, %v564
    %v566 = vpop.f32.mrf.mxu0
    %567 = vmatprep.mubr.bf16.mxu0 0
    %568 = vmatmul.mubr.bf16.gmra.mxu0 %v445
    %v569 = vpop.f32.mrf.mxu0
    %v570 = vadd.f32 %v462, %v569
    %v571 = vpop.f32.mrf.mxu0
    %v572 = vpop.f32.mrf.mxu0
    %v573 = vadd.f32 %v462, %v572
    %v574 = vpop.f32.mrf.mxu0
    %575 = vmatprep.mubr.bf16.mxu0 0
    %576 = vmatmul.mubr.bf16.gmra.mxu0 %v446
    %v577 = vpop.f32.mrf.mxu0
    %v578 = vadd.f32 %v462, %v577
    %v579 = vpop.f32.mrf.mxu0
    %v580 = vpop.f32.mrf.mxu0
    %v581 = vadd.f32 %v462, %v580
    %v582 = vpop.f32.mrf.mxu0
    %583 = vmatprep.mubr.bf16.mxu0 0
    %584 = vmatmul.mubr.bf16.gmra.mxu0 %v447
    %v585 = vpop.f32.mrf.mxu0
    %v586 = vadd.f32 %v462, %v585
    %v587 = vpop.f32.mrf.mxu0
    %v588 = vpop.f32.mrf.mxu0
    %v589 = vadd.f32 %v462, %v588
    %v590 = vpop.f32.mrf.mxu0
    %591 = vmatprep.mubr.bf16.mxu0 0
    %592 = vmatmul.mubr.bf16.gmra.mxu0 %v448
    %v593 = vpop.f32.mrf.mxu0
    %v594 = vadd.f32 %v462, %v593
    %v595 = vpop.f32.mrf.mxu0
    %v596 = vpop.f32.mrf.mxu0
    %v597 = vadd.f32 %v462, %v596
    %v598 = vpop.f32.mrf.mxu0
    %599 = vmatprep.mubr.bf16.mxu0 0
    %600 = vmatmul.mubr.bf16.gmra.mxu0 %v449
    %v601 = vpop.f32.mrf.mxu0
    %v602 = vadd.f32 %v462, %v601
    %v603 = vpop.f32.mrf.mxu0
    %v604 = vpop.f32.mrf.mxu0
    %v605 = vadd.f32 %v462, %v604
    %v606 = vpop.f32.mrf.mxu0
    %607 = vmatprep.mubr.bf16.mxu0 0
    %608 = vmatmul.mubr.bf16.gmra.mxu0 %v450
    %v609 = vpop.f32.mrf.mxu0
    %v610 = vadd.f32 %v462, %v609
    %v611 = vpop.f32.mrf.mxu0
    %v612 = vpop.f32.mrf.mxu0
    %v613 = vadd.f32 %v462, %v612
    %v614 = vpop.f32.mrf.mxu0
    %615 = vmatprep.mubr.bf16.mxu0 0
    %616 = vmatmul.mubr.bf16.gmra.mxu0 %v451
    %v617 = vpop.f32.mrf.mxu0
    %v618 = vadd.f32 %v462, %v617
    %v619 = vpop.f32.mrf.mxu0
    %v620 = vpop.f32.mrf.mxu0
    %v621 = vadd.f32 %v462, %v620
    %v622 = vpop.f32.mrf.mxu0
    %623 = vmatprep.mubr.bf16.mxu0 0
    %624 = vmatmul.mubr.bf16.gmra.mxu0 %v452
    %v625 = vpop.f32.mrf.mxu0
    %v626 = vadd.f32 %v462, %v625
    %v627 = vpop.f32.mrf.mxu0
    %v628 = vpop.f32.mrf.mxu0
    %v629 = vadd.f32 %v462, %v628
    %v630 = vpop.f32.mrf.mxu0
    %631 = vmatprep.mubr.bf16.mxu0 0
    %632 = vmatmul.mubr.bf16.gmra.mxu0 %v453
    %v633 = vpop.f32.mrf.mxu0
    %v634 = vadd.f32 %v462, %v633
    %v635 = vpop.f32.mrf.mxu0
    %v636 = vpop.f32.mrf.mxu0
    %v637 = vadd.f32 %v462, %v636
    %v638 = vpop.f32.mrf.mxu0
    %639 = vmatprep.mubr.bf16.mxu0 0
    %640 = vmatmul.mubr.bf16.gmra.mxu0 %v454
    %v641 = vpop.f32.mrf.mxu0
    %v642 = vadd.f32 %v462, %v641
    %v643 = vpop.f32.mrf.mxu0
    %v644 = vpop.f32.mrf.mxu0
    %v645 = vadd.f32 %v462, %v644
    %v646 = vpop.f32.mrf.mxu0
    %647 = vmatprep.mubr.bf16.mxu0 0
    %648 = vmatmul.mubr.bf16.gmra.mxu0 %v455
    %v649 = vpop.f32.mrf.mxu0
    %v650 = vadd.f32 %v462, %v649
    %v651 = vpop.f32.mrf.mxu0
    %v652 = vpop.f32.mrf.mxu0
    %v653 = vadd.f32 %v462, %v652
    %v654 = vpop.f32.mrf.mxu0
    %655 = vmatprep.mubr.bf16.mxu0 0
    %656 = vmatmul.mubr.bf16.gmra.mxu0 %v456
    %v657 = vpop.f32.mrf.mxu0
    %v658 = vadd.f32 %v462, %v657
    %v659 = vpop.f32.mrf.mxu0
    %v660 = vpop.f32.mrf.mxu0
    %v661 = vadd.f32 %v462, %v660
    %v662 = vpop.f32.mrf.mxu0
    %663 = vmatprep.mubr.bf16.mxu0 0
    %664 = vmatmul.mubr.bf16.gmra.mxu0 %v457
    %v665 = vpop.f32.mrf.mxu0
    %v666 = vadd.f32 %v462, %v665
    %v667 = vpop.f32.mrf.mxu0
    %v668 = vpop.f32.mrf.mxu0
    %v669 = vadd.f32 %v462, %v668
    %v670 = vpop.f32.mrf.mxu0
    %671 = vdwg.mxu0
    %s672 = scalar_lea.vmem [#allocation2], 64
    %v673 = vld [vmem:[%s672] sm:$0xf]
    %v674 = vld [vmem:[%s672 + $0x4] sm:$0xf]
    %v675 = vld [vmem:[%s672 + $0x8] sm:$0xf]
    %v676 = vld [vmem:[%s672 + $0xc] sm:$0xf]
    %v677 = vld [vmem:[%s672 + $0x10] sm:$0xf]
    %v678 = vld [vmem:[%s672 + $0x14] sm:$0xf]
    %v679 = vld [vmem:[%s672 + $0x18] sm:$0xf]
    %v680 = vld [vmem:[%s672 + $0x1c] sm:$0xf]
    %v681 = vld [vmem:[%s672 + $0x20] sm:$0xf]
    %v682 = vld [vmem:[%s672 + $0x24] sm:$0xf]
    %v683 = vld [vmem:[%s672 + $0x28] sm:$0xf]
    %v684 = vld [vmem:[%s672 + $0x2c] sm:$0xf]
    %v685 = vld [vmem:[%s672 + $0x30] sm:$0xf]
    %v686 = vld [vmem:[%s672 + $0x34] sm:$0xf]
    %v687 = vld [vmem:[%s672 + $0x38] sm:$0xf]
    %v688 = vld [vmem:[%s672 + $0x3c] sm:$0xf]
    %s689 = scalar_lea.vmem [#allocation2], 128
    %v690 = vld [vmem:[%s689] sm:$0xf]
    %v691 = vld [vmem:[%s689 + $0x4] sm:$0xf]
    %v692 = vld [vmem:[%s689 + $0x8] sm:$0xf]
    %v693 = vld [vmem:[%s689 + $0xc] sm:$0xf]
    %v694 = vld [vmem:[%s689 + $0x10] sm:$0xf]
    %v695 = vld [vmem:[%s689 + $0x14] sm:$0xf]
    %v696 = vld [vmem:[%s689 + $0x18] sm:$0xf]
    %v697 = vld [vmem:[%s689 + $0x1c] sm:$0xf]
    %v698 = vld [vmem:[%s689 + $0x20] sm:$0xf]
    %v699 = vld [vmem:[%s689 + $0x24] sm:$0xf]
    %v700 = vld [vmem:[%s689 + $0x28] sm:$0xf]
    %v701 = vld [vmem:[%s689 + $0x2c] sm:$0xf]
    %v702 = vld [vmem:[%s689 + $0x30] sm:$0xf]
    %v703 = vld [vmem:[%s689 + $0x34] sm:$0xf]
    %v704 = vld [vmem:[%s689 + $0x38] sm:$0xf]
    %v705 = vld [vmem:[%s689 + $0x3c] sm:$0xf]
    %v706 = vld [vmem:[%s2 + $0x5] sm:$0x1]
    %v707 = vmax.f32 %v546, 0.0
    %v708 = vmax.f32 %v549, 0.0
    %v709 = vmax.f32 %v554, 0.0
    %v710 = vmax.f32 %v557, 0.0
    %v711 = vmax.f32 %v562, 0.0
    %v712 = vmax.f32 %v565, 0.0
    %v713 = vmax.f32 %v570, 0.0
    %v714 = vmax.f32 %v573, 0.0
    %v715 = vmax.f32 %v578, 0.0
    %v716 = vmax.f32 %v581, 0.0
    %v717 = vmax.f32 %v586, 0.0
    %v718 = vmax.f32 %v589, 0.0
    %v719 = vmax.f32 %v594, 0.0
    %v720 = vmax.f32 %v597, 0.0
    %v721 = vmax.f32 %v602, 0.0
    %v722 = vmax.f32 %v605, 0.0
    %v723 = vmax.f32 %v610, 0.0
    %v724 = vmax.f32 %v613, 0.0
    %v725 = vmax.f32 %v618, 0.0
    %v726 = vmax.f32 %v621, 0.0
    %v727 = vmax.f32 %v626, 0.0
    %v728 = vmax.f32 %v629, 0.0
    %v729 = vmax.f32 %v634, 0.0
    %v730 = vmax.f32 %v637, 0.0
    %v731 = vmax.f32 %v642, 0.0
    %v732 = vmax.f32 %v645, 0.0
    %v733 = vmax.f32 %v650, 0.0
    %v734 = vmax.f32 %v653, 0.0
    %v735 = vmax.f32 %v658, 0.0
    %v736 = vmax.f32 %v661, 0.0
    %v737 = vmax.f32 %v666, 0.0
    %v738 = vmax.f32 %v669, 0.0
    %v739 = vmax.f32 %v707, %v711
    %v740 = vmax.f32 %v709, %v713
    %v741 = vmax.f32 %v739, %v715
    %v742 = vmax.f32 %v740, %v717
    %v743 = vmax.f32 %v741, %v719
    %v744 = vmax.f32 %v742, %v721
    %v745 = vmax.f32 %v743, %v723
    %v746 = vmax.f32 %v744, %v725
    %v747 = vmax.f32 %v745, %v727
    %v748 = vmax.f32 %v746, %v729
    %v749 = vmax.f32 %v747, %v731
    %v750 = vmax.f32 %v748, %v733
    %v751 = vmax.f32 %v749, %v735
    %v752 = vmax.f32 %v750, %v737
    %v753 = vmax.f32 %v751, %v752
    %v754 = vmax.f32 %v708, %v712
    %v755 = vmax.f32 %v710, %v714
    %v756 = vmax.f32 %v754, %v716
    %v757 = vmax.f32 %v755, %v718
    %v758 = vmax.f32 %v756, %v720
    %v759 = vmax.f32 %v757, %v722
    %v760 = vmax.f32 %v758, %v724
    %v761 = vmax.f32 %v759, %v726
    %v762 = vmax.f32 %v760, %v728
    %v763 = vmax.f32 %v761, %v730
    %v764 = vmax.f32 %v762, %v732
    %v765 = vmax.f32 %v763, %v734
    %v766 = vmax.f32 %v764, %v736
    %v767 = vmax.f32 %v765, %v738
    %v768 = vmax.f32 %v766, %v767
    %v769 = vpack.c.bf16 %v708, %v707
    %v770 = vpack.c.bf16 %v710, %v709
    %v771 = vpack.c.bf16 %v712, %v711
    %v772 = vpack.c.bf16 %v714, %v713
    %v773 = vpack.c.bf16 %v716, %v715
    %v774 = vpack.c.bf16 %v718, %v717
    %v775 = vpack.c.bf16 %v720, %v719
    %v776 = vpack.c.bf16 %v722, %v721
    %v777 = vpack.c.bf16 %v724, %v723
    %v778 = vpack.c.bf16 %v726, %v725
    %v779 = vpack.c.bf16 %v728, %v727
    %v780 = vpack.c.bf16 %v730, %v729
    %v781 = vpack.c.bf16 %v732, %v731
    %v782 = vpack.c.bf16 %v734, %v733
    %v783 = vpack.c.bf16 %v736, %v735
    %v784 = vpack.c.bf16 %v738, %v737
    %v801 = vunpack.c.l.b16 %v673
    %v802 = vunpack.c.l.b16 %v674
    %v803 = vunpack.c.l.b16 %v675
    %v804 = vunpack.c.l.b16 %v676
    %v805 = vunpack.c.l.b16 %v677
    %v806 = vunpack.c.l.b16 %v678
    %v807 = vunpack.c.l.b16 %v679
    %v808 = vunpack.c.l.b16 %v680
    %v809 = vunpack.c.l.b16 %v681
    %v810 = vunpack.c.l.b16 %v682
    %v811 = vunpack.c.l.b16 %v683
    %v812 = vunpack.c.l.b16 %v684
    %v813 = vunpack.c.l.b16 %v685
    %v814 = vunpack.c.l.b16 %v686
    %v815 = vunpack.c.l.b16 %v687
    %v816 = vunpack.c.l.b16 %v688
    %v817 = vpack.c.b16 %v802, %v801
    %v818 = vpack.c.b16 %v804, %v803
    %v819 = vpack.c.b16 %v806, %v805
    %v820 = vpack.c.b16 %v808, %v807
    %v821 = vpack.c.b16 %v810, %v809
    %v822 = vpack.c.b16 %v812, %v811
    %v823 = vpack.c.b16 %v814, %v813
    %v824 = vpack.c.b16 %v816, %v815
    %833 = vmatprep.subr.bf16.mxu0 0
    %834 = vmatpush1.bf16.msra.mxu0 %v824
    %835 = vmatprep.subr.bf16.mxu0 0
    %836 = vmatpush1.bf16.msra.mxu0 %v823
    %837 = vmatprep.subr.bf16.mxu0 0
    %838 = vmatpush1.bf16.msra.mxu0 %v822
    %839 = vmatprep.subr.bf16.mxu0 0
    %840 = vmatpush1.bf16.msra.mxu0 %v821
    %841 = vmatprep.subr.bf16.mxu0 0
    %842 = vmatpush1.bf16.msra.mxu0 %v820
    %843 = vmatprep.subr.bf16.mxu0 0
    %844 = vmatpush1.bf16.msra.mxu0 %v819
    %845 = vmatprep.subr.bf16.mxu0 0
    %846 = vmatpush1.bf16.msra.mxu0 %v818
    %847 = vmatprep.subr.bf16.mxu0 0
    %848 = vmatpush1.bf16.msra.mxu0 %v817
    %849 = vmatprep.subr.bf16.mxu0 0
    %850 = vmatpush2.bf16.msra.mxu0 0
    %851 = vmatprep.subr.bf16.mxu0 0
    %852 = vmatpush2.bf16.msra.mxu0 0
    %853 = vmatprep.subr.bf16.mxu0 0
    %854 = vmatpush2.bf16.msra.mxu0 0
    %855 = vmatprep.subr.bf16.mxu0 0
    %856 = vmatpush2.bf16.msra.mxu0 0
    %857 = vmatprep.subr.bf16.mxu0 0
    %858 = vmatpush2.bf16.msra.mxu0 0
    %859 = vmatprep.subr.bf16.mxu0 0
    %860 = vmatpush2.bf16.msra.mxu0 0
    %861 = vmatprep.subr.bf16.mxu0 0
    %862 = vmatpush2.bf16.msra.mxu0 0
    %863 = vmatprep.subr.bf16.mxu0 0
    %864 = vmatpush2.bf16.msra.mxu0 0
    %865 = vmatprep.mubr.bf16.mxu0 0
    %866 = vmatmul.mubr.bf16.gmra.mxu0 %v769
    %v867 = vpop.f32.mrf.mxu0
    %v868 = vadd.f32 0.0, %v867
    %v869 = vpop.f32.mrf.mxu0
    %v870 = vpop.f32.mrf.mxu0
    %v871 = vadd.f32 0.0, %v870
    %v872 = vpop.f32.mrf.mxu0
    %873 = vmatprep.mubr.bf16.mxu0 0
    %874 = vmatmul.mubr.bf16.gmra.mxu0 %v770
    %v875 = vpop.f32.mrf.mxu0
    %v876 = vadd.f32 0.0, %v875
    %v877 = vpop.f32.mrf.mxu0
    %v878 = vpop.f32.mrf.mxu0
    %v879 = vadd.f32 0.0, %v878
    %v880 = vpop.f32.mrf.mxu0
    %881 = vmatprep.mubr.bf16.mxu0 0
    %882 = vmatmul.mubr.bf16.gmra.mxu0 %v771
    %v883 = vpop.f32.mrf.mxu0
    %v884 = vadd.f32 0.0, %v883
    %v885 = vpop.f32.mrf.mxu0
    %v886 = vpop.f32.mrf.mxu0
    %v887 = vadd.f32 0.0, %v886
    %v888 = vpop.f32.mrf.mxu0
    %889 = vmatprep.mubr.bf16.mxu0 0
    %890 = vmatmul.mubr.bf16.gmra.mxu0 %v772
    %v891 = vpop.f32.mrf.mxu0
    %v892 = vadd.f32 0.0, %v891
    %v893 = vpop.f32.mrf.mxu0
    %v894 = vpop.f32.mrf.mxu0
    %v895 = vadd.f32 0.0, %v894
    %v896 = vpop.f32.mrf.mxu0
    %897 = vmatprep.mubr.bf16.mxu0 0
    %898 = vmatmul.mubr.bf16.gmra.mxu0 %v773
    %v899 = vpop.f32.mrf.mxu0
    %v900 = vadd.f32 0.0, %v899
    %v901 = vpop.f32.mrf.mxu0
    %v902 = vpop.f32.mrf.mxu0
    %v903 = vadd.f32 0.0, %v902
    %v904 = vpop.f32.mrf.mxu0
    %905 = vmatprep.mubr.bf16.mxu0 0
    %906 = vmatmul.mubr.bf16.gmra.mxu0 %v774
    %v907 = vpop.f32.mrf.mxu0
    %v908 = vadd.f32 0.0, %v907
    %v909 = vpop.f32.mrf.mxu0
    %v910 = vpop.f32.mrf.mxu0
    %v911 = vadd.f32 0.0, %v910
    %v912 = vpop.f32.mrf.mxu0
    %913 = vmatprep.mubr.bf16.mxu0 0
    %914 = vmatmul.mubr.bf16.gmra.mxu0 %v775
    %v915 = vpop.f32.mrf.mxu0
    %v916 = vadd.f32 0.0, %v915
    %v917 = vpop.f32.mrf.mxu0
    %v918 = vpop.f32.mrf.mxu0
    %v919 = vadd.f32 0.0, %v918
    %v920 = vpop.f32.mrf.mxu0
    %921 = vmatprep.mubr.bf16.mxu0 0
    %922 = vmatmul.mubr.bf16.gmra.mxu0 %v776
    %v923 = vpop.f32.mrf.mxu0
    %v924 = vadd.f32 0.0, %v923
    %v925 = vpop.f32.mrf.mxu0
    %v926 = vpop.f32.mrf.mxu0
    %v927 = vadd.f32 0.0, %v926
    %v928 = vpop.f32.mrf.mxu0
    %929 = vmatprep.mubr.bf16.mxu0 0
    %930 = vmatmul.mubr.bf16.gmra.mxu0 %v777
    %v931 = vpop.f32.mrf.mxu0
    %v932 = vadd.f32 0.0, %v931
    %v933 = vpop.f32.mrf.mxu0
    %v934 = vpop.f32.mrf.mxu0
    %v935 = vadd.f32 0.0, %v934
    %v936 = vpop.f32.mrf.mxu0
    %937 = vmatprep.mubr.bf16.mxu0 0
    %938 = vmatmul.mubr.bf16.gmra.mxu0 %v778
    %v939 = vpop.f32.mrf.mxu0
    %v940 = vadd.f32 0.0, %v939
    %v941 = vpop.f32.mrf.mxu0
    %v942 = vpop.f32.mrf.mxu0
    %v943 = vadd.f32 0.0, %v942
    %v944 = vpop.f32.mrf.mxu0
    %945 = vmatprep.mubr.bf16.mxu0 0
    %946 = vmatmul.mubr.bf16.gmra.mxu0 %v779
    %v947 = vpop.f32.mrf.mxu0
    %v948 = vadd.f32 0.0, %v947
    %v949 = vpop.f32.mrf.mxu0
    %v950 = vpop.f32.mrf.mxu0
    %v951 = vadd.f32 0.0, %v950
    %v952 = vpop.f32.mrf.mxu0
    %953 = vmatprep.mubr.bf16.mxu0 0
    %954 = vmatmul.mubr.bf16.gmra.mxu0 %v780
    %v955 = vpop.f32.mrf.mxu0
    %v956 = vadd.f32 0.0, %v955
    %v957 = vpop.f32.mrf.mxu0
    %v958 = vpop.f32.mrf.mxu0
    %v959 = vadd.f32 0.0, %v958
    %v960 = vpop.f32.mrf.mxu0
    %961 = vmatprep.mubr.bf16.mxu0 0
    %962 = vmatmul.mubr.bf16.gmra.mxu0 %v781
    %v963 = vpop.f32.mrf.mxu0
    %v964 = vadd.f32 0.0, %v963
    %v965 = vpop.f32.mrf.mxu0
    %v966 = vpop.f32.mrf.mxu0
    %v967 = vadd.f32 0.0, %v966
    %v968 = vpop.f32.mrf.mxu0
    %969 = vmatprep.mubr.bf16.mxu0 0
    %970 = vmatmul.mubr.bf16.gmra.mxu0 %v782
    %v971 = vpop.f32.mrf.mxu0
    %v972 = vadd.f32 0.0, %v971
    %v973 = vpop.f32.mrf.mxu0
    %v974 = vpop.f32.mrf.mxu0
    %v975 = vadd.f32 0.0, %v974
    %v976 = vpop.f32.mrf.mxu0
    %977 = vmatprep.mubr.bf16.mxu0 0
    %978 = vmatmul.mubr.bf16.gmra.mxu0 %v783
    %v979 = vpop.f32.mrf.mxu0
    %v980 = vadd.f32 0.0, %v979
    %v981 = vpop.f32.mrf.mxu0
    %v982 = vpop.f32.mrf.mxu0
    %v983 = vadd.f32 0.0, %v982
    %v984 = vpop.f32.mrf.mxu0
    %985 = vmatprep.mubr.bf16.mxu0 0
    %986 = vmatmul.mubr.bf16.gmra.mxu0 %v784
    %v987 = vpop.f32.mrf.mxu0
    %v988 = vadd.f32 0.0, %v987
    %v989 = vpop.f32.mrf.mxu0
    %v990 = vpop.f32.mrf.mxu0
    %v991 = vadd.f32 0.0, %v990
    %v992 = vpop.f32.mrf.mxu0
    %993 = vdwg.mxu0
    %v994 = vpack.c.bf16 %v768, %v753
    %v995 = vlaneseq
    %v996 = vshrl.u32 %v995, 7
    %v997 = vsub.s32 0, %v996
    %v998 = vrot.slane %v706, %v997
    %v1015 = vunpack.c.l.b16 %v690
    %v1016 = vunpack.c.l.b16 %v691
    %v1017 = vunpack.c.l.b16 %v692
    %v1018 = vunpack.c.l.b16 %v693
    %v1019 = vunpack.c.l.b16 %v694
    %v1020 = vunpack.c.l.b16 %v695
    %v1021 = vunpack.c.l.b16 %v696
    %v1022 = vunpack.c.l.b16 %v697
    %v1023 = vunpack.c.l.b16 %v698
    %v1024 = vunpack.c.l.b16 %v699
    %v1025 = vunpack.c.l.b16 %v700
    %v1026 = vunpack.c.l.b16 %v701
    %v1027 = vunpack.c.l.b16 %v702
    %v1028 = vunpack.c.l.b16 %v703
    %v1029 = vunpack.c.l.b16 %v704
    %v1030 = vunpack.c.l.b16 %v705
    %v1031 = vpack.c.b16 %v1016, %v1015
    %v1032 = vpack.c.b16 %v1018, %v1017
    %v1033 = vpack.c.b16 %v1020, %v1019
    %v1034 = vpack.c.b16 %v1022, %v1021
    %v1035 = vpack.c.b16 %v1024, %v1023
    %v1036 = vpack.c.b16 %v1026, %v1025
    %v1037 = vpack.c.b16 %v1028, %v1027
    %v1038 = vpack.c.b16 %v1030, %v1029
    %1047 = vmatprep.subr.bf16.mxu0 0
    %1048 = vmatpush1.bf16.msra.mxu0 %v1038
    %1049 = vmatprep.subr.bf16.mxu0 0
    %1050 = vmatpush1.bf16.msra.mxu0 %v1037
    %1051 = vmatprep.subr.bf16.mxu0 0
    %1052 = vmatpush1.bf16.msra.mxu0 %v1036
    %1053 = vmatprep.subr.bf16.mxu0 0
    %1054 = vmatpush1.bf16.msra.mxu0 %v1035
    %1055 = vmatprep.subr.bf16.mxu0 0
    %1056 = vmatpush1.bf16.msra.mxu0 %v1034
    %1057 = vmatprep.subr.bf16.mxu0 0
    %1058 = vmatpush1.bf16.msra.mxu0 %v1033
    %1059 = vmatprep.subr.bf16.mxu0 0
    %1060 = vmatpush1.bf16.msra.mxu0 %v1032
    %1061 = vmatprep.subr.bf16.mxu0 0
    %1062 = vmatpush1.bf16.msra.mxu0 %v1031
    %1063 = vmatprep.subr.bf16.mxu0 0
    %1064 = vmatpush2.bf16.msra.mxu0 0
    %1065 = vmatprep.subr.bf16.mxu0 0
    %1066 = vmatpush2.bf16.msra.mxu0 0
    %1067 = vmatprep.subr.bf16.mxu0 0
    %1068 = vmatpush2.bf16.msra.mxu0 0
    %1069 = vmatprep.subr.bf16.mxu0 0
    %1070 = vmatpush2.bf16.msra.mxu0 0
    %1071 = vmatprep.subr.bf16.mxu0 0
    %1072 = vmatpush2.bf16.msra.mxu0 0
    %1073 = vmatprep.subr.bf16.mxu0 0
    %1074 = vmatpush2.bf16.msra.mxu0 0
    %1075 = vmatprep.subr.bf16.mxu0 0
    %1076 = vmatpush2.bf16.msra.mxu0 0
    %1077 = vmatprep.subr.bf16.mxu0 0
    %1078 = vmatpush2.bf16.msra.mxu0 0
    %1079 = vmatprep.mubr.bf16.mxu0 0
    %1080 = vmatmul.mubr.bf16.gmra.mxu0 %v994
    %v1081 = vpop.f32.mrf.mxu0
    %v1082 = vadd.f32 %v998, %v1081
    %v1083 = vpop.f32.mrf.mxu0
    %v1084 = vpop.f32.mrf.mxu0
    %v1085 = vadd.f32 %v998, %v1084
    %v1086 = vpop.f32.mrf.mxu0
    %1087 = vdwg.mxu0
    %v1088 = vadd.f32 %v868, %v1082
    %v1089 = vadd.f32 %v871, %v1085
    %v1090 = vadd.f32 %v876, %v1082
    %v1091 = vadd.f32 %v879, %v1085
    %v1092 = vadd.f32 %v884, %v1082
    %v1093 = vadd.f32 %v887, %v1085
    %v1094 = vadd.f32 %v892, %v1082
    %v1095 = vadd.f32 %v895, %v1085
    %v1096 = vadd.f32 %v900, %v1082
    %v1097 = vadd.f32 %v903, %v1085
    %v1098 = vadd.f32 %v908, %v1082
    %v1099 = vadd.f32 %v911, %v1085
    %v1100 = vadd.f32 %v916, %v1082
    %v1101 = vadd.f32 %v919, %v1085
    %v1102 = vadd.f32 %v924, %v1082
    %v1103 = vadd.f32 %v927, %v1085
    %v1104 = vadd.f32 %v932, %v1082
    %v1105 = vadd.f32 %v935, %v1085
    %v1106 = vadd.f32 %v940, %v1082
    %v1107 = vadd.f32 %v943, %v1085
    %v1108 = vadd.f32 %v948, %v1082
    %v1109 = vadd.f32 %v951, %v1085
    %v1110 = vadd.f32 %v956, %v1082
    %v1111 = vadd.f32 %v959, %v1085
    %v1112 = vadd.f32 %v964, %v1082
    %v1113 = vadd.f32 %v967, %v1085
    %v1114 = vadd.f32 %v972, %v1082
    %v1115 = vadd.f32 %v975, %v1085
    %v1116 = vadd.f32 %v980, %v1082
    %v1117 = vadd.f32 %v983, %v1085
    %v1118 = vadd.f32 %v988, %v1082
    %v1119 = vadd.f32 %v991, %v1085
    %s1120 = scalar_lea.vmem [#allocation2], 192
    %v1121 = vld [vmem:[%s1120] sm:$0xf]
    %v1122 = vld [vmem:[%s1120 + $0x4] sm:$0xf]
    %v1123 = vld [vmem:[%s1120 + $0x8] sm:$0xf]
    %v1124 = vld [vmem:[%s1120 + $0xc] sm:$0xf]
    %v1125 = vld [vmem:[%s1120 + $0x10] sm:$0xf]
    %v1126 = vld [vmem:[%s1120 + $0x14] sm:$0xf]
    %v1127 = vld [vmem:[%s1120 + $0x18] sm:$0xf]
    %v1128 = vld [vmem:[%s1120 + $0x1c] sm:$0xf]
    %v1129 = vld [vmem:[%s1120 + $0x20] sm:$0xf]
    %v1130 = vld [vmem:[%s1120 + $0x24] sm:$0xf]
    %v1131 = vld [vmem:[%s1120 + $0x28] sm:$0xf]
    %v1132 = vld [vmem:[%s1120 + $0x2c] sm:$0xf]
    %v1133 = vld [vmem:[%s1120 + $0x30] sm:$0xf]
    %v1134 = vld [vmem:[%s1120 + $0x34] sm:$0xf]
    %v1135 = vld [vmem:[%s1120 + $0x38] sm:$0xf]
    %v1136 = vld [vmem:[%s1120 + $0x3c] sm:$0xf]
    %s1137 = scalar_lea.vmem [#allocation2], 256
    %v1138 = vld [vmem:[%s1137] sm:$0xf]
    %v1139 = vld [vmem:[%s1137 + $0x4] sm:$0xf]
    %v1140 = vld [vmem:[%s1137 + $0x8] sm:$0xf]
    %v1141 = vld [vmem:[%s1137 + $0xc] sm:$0xf]
    %v1142 = vld [vmem:[%s1137 + $0x10] sm:$0xf]
    %v1143 = vld [vmem:[%s1137 + $0x14] sm:$0xf]
    %v1144 = vld [vmem:[%s1137 + $0x18] sm:$0xf]
    %v1145 = vld [vmem:[%s1137 + $0x1c] sm:$0xf]
    %v1146 = vld [vmem:[%s1137 + $0x20] sm:$0xf]
    %v1147 = vld [vmem:[%s1137 + $0x24] sm:$0xf]
    %v1148 = vld [vmem:[%s1137 + $0x28] sm:$0xf]
    %v1149 = vld [vmem:[%s1137 + $0x2c] sm:$0xf]
    %v1150 = vld [vmem:[%s1137 + $0x30] sm:$0xf]
    %v1151 = vld [vmem:[%s1137 + $0x34] sm:$0xf]
    %v1152 = vld [vmem:[%s1137 + $0x38] sm:$0xf]
    %v1153 = vld [vmem:[%s1137 + $0x3c] sm:$0xf]
    %v1154 = vld [vmem:[%s2 + $0x6] sm:$0x1]
    %v1155 = vmax.f32 %v1088, 0.0
    %v1156 = vmax.f32 %v1089, 0.0
    %v1157 = vmax.f32 %v1090, 0.0
    %v1158 = vmax.f32 %v1091, 0.0
    %v1159 = vmax.f32 %v1092, 0.0
    %v1160 = vmax.f32 %v1093, 0.0
    %v1161 = vmax.f32 %v1094, 0.0
    %v1162 = vmax.f32 %v1095, 0.0
    %v1163 = vmax.f32 %v1096, 0.0
    %v1164 = vmax.f32 %v1097, 0.0
    %v1165 = vmax.f32 %v1098, 0.0
    %v1166 = vmax.f32 %v1099, 0.0
    %v1167 = vmax.f32 %v1100, 0.0
    %v1168 = vmax.f32 %v1101, 0.0
    %v1169 = vmax.f32 %v1102, 0.0
    %v1170 = vmax.f32 %v1103, 0.0
    %v1171 = vmax.f32 %v1104, 0.0
    %v1172 = vmax.f32 %v1105, 0.0
    %v1173 = vmax.f32 %v1106, 0.0
    %v1174 = vmax.f32 %v1107, 0.0
    %v1175 = vmax.f32 %v1108, 0.0
    %v1176 = vmax.f32 %v1109, 0.0
    %v1177 = vmax.f32 %v1110, 0.0
    %v1178 = vmax.f32 %v1111, 0.0
    %v1179 = vmax.f32 %v1112, 0.0
    %v1180 = vmax.f32 %v1113, 0.0
    %v1181 = vmax.f32 %v1114, 0.0
    %v1182 = vmax.f32 %v1115, 0.0
    %v1183 = vmax.f32 %v1116, 0.0
    %v1184 = vmax.f32 %v1117, 0.0
    %v1185 = vmax.f32 %v1118, 0.0
    %v1186 = vmax.f32 %v1119, 0.0
    %v1187 = vmax.f32 %v1155, %v1159
    %v1188 = vmax.f32 %v1157, %v1161
    %v1189 = vmax.f32 %v1187, %v1163
    %v1190 = vmax.f32 %v1188, %v1165
    %v1191 = vmax.f32 %v1189, %v1167
    %v1192 = vmax.f32 %v1190, %v1169
    %v1193 = vmax.f32 %v1191, %v1171
    %v1194 = vmax.f32 %v1192, %v1173
    %v1195 = vmax.f32 %v1193, %v1175
    %v1196 = vmax.f32 %v1194, %v1177
    %v1197 = vmax.f32 %v1195, %v1179
    %v1198 = vmax.f32 %v1196, %v1181
    %v1199 = vmax.f32 %v1197, %v1183
    %v1200 = vmax.f32 %v1198, %v1185
    %v1201 = vmax.f32 %v1199, %v1200
    %v1202 = vmax.f32 %v1156, %v1160
    %v1203 = vmax.f32 %v1158, %v1162
    %v1204 = vmax.f32 %v1202, %v1164
    %v1205 = vmax.f32 %v1203, %v1166
    %v1206 = vmax.f32 %v1204, %v1168
    %v1207 = vmax.f32 %v1205, %v1170
    %v1208 = vmax.f32 %v1206, %v1172
    %v1209 = vmax.f32 %v1207, %v1174
    %v1210 = vmax.f32 %v1208, %v1176
    %v1211 = vmax.f32 %v1209, %v1178
    %v1212 = vmax.f32 %v1210, %v1180
    %v1213 = vmax.f32 %v1211, %v1182
    %v1214 = vmax.f32 %v1212, %v1184
    %v1215 = vmax.f32 %v1213, %v1186
    %v1216 = vmax.f32 %v1214, %v1215
    %v1217 = vpack.c.bf16 %v1156, %v1155
    %v1218 = vpack.c.bf16 %v1158, %v1157
    %v1219 = vpack.c.bf16 %v1160, %v1159
    %v1220 = vpack.c.bf16 %v1162, %v1161
    %v1221 = vpack.c.bf16 %v1164, %v1163
    %v1222 = vpack.c.bf16 %v1166, %v1165
    %v1223 = vpack.c.bf16 %v1168, %v1167
    %v1224 = vpack.c.bf16 %v1170, %v1169
    %v1225 = vpack.c.bf16 %v1172, %v1171
    %v1226 = vpack.c.bf16 %v1174, %v1173
    %v1227 = vpack.c.bf16 %v1176, %v1175
    %v1228 = vpack.c.bf16 %v1178, %v1177
    %v1229 = vpack.c.bf16 %v1180, %v1179
    %v1230 = vpack.c.bf16 %v1182, %v1181
    %v1231 = vpack.c.bf16 %v1184, %v1183
    %v1232 = vpack.c.bf16 %v1186, %v1185
    %v1249 = vunpack.c.l.b16 %v1121
    %v1250 = vunpack.c.l.b16 %v1122
    %v1251 = vunpack.c.l.b16 %v1123
    %v1252 = vunpack.c.l.b16 %v1124
    %v1253 = vunpack.c.l.b16 %v1125
    %v1254 = vunpack.c.l.b16 %v1126
    %v1255 = vunpack.c.l.b16 %v1127
    %v1256 = vunpack.c.l.b16 %v1128
    %v1257 = vunpack.c.l.b16 %v1129
    %v1258 = vunpack.c.l.b16 %v1130
    %v1259 = vunpack.c.l.b16 %v1131
    %v1260 = vunpack.c.l.b16 %v1132
    %v1261 = vunpack.c.l.b16 %v1133
    %v1262 = vunpack.c.l.b16 %v1134
    %v1263 = vunpack.c.l.b16 %v1135
    %v1264 = vunpack.c.l.b16 %v1136
    %v1265 = vpack.c.b16 %v1250, %v1249
    %v1266 = vpack.c.b16 %v1252, %v1251
    %v1267 = vpack.c.b16 %v1254, %v1253
    %v1268 = vpack.c.b16 %v1256, %v1255
    %v1269 = vpack.c.b16 %v1258, %v1257
    %v1270 = vpack.c.b16 %v1260, %v1259
    %v1271 = vpack.c.b16 %v1262, %v1261
    %v1272 = vpack.c.b16 %v1264, %v1263
    %1281 = vmatprep.subr.bf16.mxu0 0
    %1282 = vmatpush1.bf16.msra.mxu0 %v1272
    %1283 = vmatprep.subr.bf16.mxu0 0
    %1284 = vmatpush1.bf16.msra.mxu0 %v1271
    %1285 = vmatprep.subr.bf16.mxu0 0
    %1286 = vmatpush1.bf16.msra.mxu0 %v1270
    %1287 = vmatprep.subr.bf16.mxu0 0
    %1288 = vmatpush1.bf16.msra.mxu0 %v1269
    %1289 = vmatprep.subr.bf16.mxu0 0
    %1290 = vmatpush1.bf16.msra.mxu0 %v1268
    %1291 = vmatprep.subr.bf16.mxu0 0
    %1292 = vmatpush1.bf16.msra.mxu0 %v1267
    %1293 = vmatprep.subr.bf16.mxu0 0
    %1294 = vmatpush1.bf16.msra.mxu0 %v1266
    %1295 = vmatprep.subr.bf16.mxu0 0
    %1296 = vmatpush1.bf16.msra.mxu0 %v1265
    %1297 = vmatprep.subr.bf16.mxu0 0
    %1298 = vmatpush2.bf16.msra.mxu0 0
    %1299 = vmatprep.subr.bf16.mxu0 0
    %1300 = vmatpush2.bf16.msra.mxu0 0
    %1301 = vmatprep.subr.bf16.mxu0 0
    %1302 = vmatpush2.bf16.msra.mxu0 0
    %1303 = vmatprep.subr.bf16.mxu0 0
    %1304 = vmatpush2.bf16.msra.mxu0 0
    %1305 = vmatprep.subr.bf16.mxu0 0
    %1306 = vmatpush2.bf16.msra.mxu0 0
    %1307 = vmatprep.subr.bf16.mxu0 0
    %1308 = vmatpush2.bf16.msra.mxu0 0
    %1309 = vmatprep.subr.bf16.mxu0 0
    %1310 = vmatpush2.bf16.msra.mxu0 0
    %1311 = vmatprep.subr.bf16.mxu0 0
    %1312 = vmatpush2.bf16.msra.mxu0 0
    %1313 = vmatprep.mubr.bf16.mxu0 0
    %1314 = vmatmul.mubr.bf16.gmra.mxu0 %v1217
    %v1315 = vpop.f32.mrf.mxu0
    %v1316 = vadd.f32 0.0, %v1315
    %v1317 = vpop.f32.mrf.mxu0
    %v1318 = vpop.f32.mrf.mxu0
    %v1319 = vadd.f32 0.0, %v1318
    %v1320 = vpop.f32.mrf.mxu0
    %1321 = vmatprep.mubr.bf16.mxu0 0
    %1322 = vmatmul.mubr.bf16.gmra.mxu0 %v1218
    %v1323 = vpop.f32.mrf.mxu0
    %v1324 = vadd.f32 0.0, %v1323
    %v1325 = vpop.f32.mrf.mxu0
    %v1326 = vpop.f32.mrf.mxu0
    %v1327 = vadd.f32 0.0, %v1326
    %v1328 = vpop.f32.mrf.mxu0
    %1329 = vmatprep.mubr.bf16.mxu0 0
    %1330 = vmatmul.mubr.bf16.gmra.mxu0 %v1219
    %v1331 = vpop.f32.mrf.mxu0
    %v1332 = vadd.f32 0.0, %v1331
    %v1333 = vpop.f32.mrf.mxu0
    %v1334 = vpop.f32.mrf.mxu0
    %v1335 = vadd.f32 0.0, %v1334
    %v1336 = vpop.f32.mrf.mxu0
    %1337 = vmatprep.mubr.bf16.mxu0 0
    %1338 = vmatmul.mubr.bf16.gmra.mxu0 %v1220
    %v1339 = vpop.f32.mrf.mxu0
    %v1340 = vadd.f32 0.0, %v1339
    %v1341 = vpop.f32.mrf.mxu0
    %v1342 = vpop.f32.mrf.mxu0
    %v1343 = vadd.f32 0.0, %v1342
    %v1344 = vpop.f32.mrf.mxu0
    %1345 = vmatprep.mubr.bf16.mxu0 0
    %1346 = vmatmul.mubr.bf16.gmra.mxu0 %v1221
    %v1347 = vpop.f32.mrf.mxu0
    %v1348 = vadd.f32 0.0, %v1347
    %v1349 = vpop.f32.mrf.mxu0
    %v1350 = vpop.f32.mrf.mxu0
    %v1351 = vadd.f32 0.0, %v1350
    %v1352 = vpop.f32.mrf.mxu0
    %1353 = vmatprep.mubr.bf16.mxu0 0
    %1354 = vmatmul.mubr.bf16.gmra.mxu0 %v1222
    %v1355 = vpop.f32.mrf.mxu0
    %v1356 = vadd.f32 0.0, %v1355
    %v1357 = vpop.f32.mrf.mxu0
    %v1358 = vpop.f32.mrf.mxu0
    %v1359 = vadd.f32 0.0, %v1358
    %v1360 = vpop.f32.mrf.mxu0
    %1361 = vmatprep.mubr.bf16.mxu0 0
    %1362 = vmatmul.mubr.bf16.gmra.mxu0 %v1223
    %v1363 = vpop.f32.mrf.mxu0
    %v1364 = vadd.f32 0.0, %v1363
    %v1365 = vpop.f32.mrf.mxu0
    %v1366 = vpop.f32.mrf.mxu0
    %v1367 = vadd.f32 0.0, %v1366
    %v1368 = vpop.f32.mrf.mxu0
    %1369 = vmatprep.mubr.bf16.mxu0 0
    %1370 = vmatmul.mubr.bf16.gmra.mxu0 %v1224
    %v1371 = vpop.f32.mrf.mxu0
    %v1372 = vadd.f32 0.0, %v1371
    %v1373 = vpop.f32.mrf.mxu0
    %v1374 = vpop.f32.mrf.mxu0
    %v1375 = vadd.f32 0.0, %v1374
    %v1376 = vpop.f32.mrf.mxu0
    %1377 = vmatprep.mubr.bf16.mxu0 0
    %1378 = vmatmul.mubr.bf16.gmra.mxu0 %v1225
    %v1379 = vpop.f32.mrf.mxu0
    %v1380 = vadd.f32 0.0, %v1379
    %v1381 = vpop.f32.mrf.mxu0
    %v1382 = vpop.f32.mrf.mxu0
    %v1383 = vadd.f32 0.0, %v1382
    %v1384 = vpop.f32.mrf.mxu0
    %1385 = vmatprep.mubr.bf16.mxu0 0
    %1386 = vmatmul.mubr.bf16.gmra.mxu0 %v1226
    %v1387 = vpop.f32.mrf.mxu0
    %v1388 = vadd.f32 0.0, %v1387
    %v1389 = vpop.f32.mrf.mxu0
    %v1390 = vpop.f32.mrf.mxu0
    %v1391 = vadd.f32 0.0, %v1390
    %v1392 = vpop.f32.mrf.mxu0
    %1393 = vmatprep.mubr.bf16.mxu0 0
    %1394 = vmatmul.mubr.bf16.gmra.mxu0 %v1227
    %v1395 = vpop.f32.mrf.mxu0
    %v1396 = vadd.f32 0.0, %v1395
    %v1397 = vpop.f32.mrf.mxu0
    %v1398 = vpop.f32.mrf.mxu0
    %v1399 = vadd.f32 0.0, %v1398
    %v1400 = vpop.f32.mrf.mxu0
    %1401 = vmatprep.mubr.bf16.mxu0 0
    %1402 = vmatmul.mubr.bf16.gmra.mxu0 %v1228
    %v1403 = vpop.f32.mrf.mxu0
    %v1404 = vadd.f32 0.0, %v1403
    %v1405 = vpop.f32.mrf.mxu0
    %v1406 = vpop.f32.mrf.mxu0
    %v1407 = vadd.f32 0.0, %v1406
    %v1408 = vpop.f32.mrf.mxu0
    %1409 = vmatprep.mubr.bf16.mxu0 0
    %1410 = vmatmul.mubr.bf16.gmra.mxu0 %v1229
    %v1411 = vpop.f32.mrf.mxu0
    %v1412 = vadd.f32 0.0, %v1411
    %v1413 = vpop.f32.mrf.mxu0
    %v1414 = vpop.f32.mrf.mxu0
    %v1415 = vadd.f32 0.0, %v1414
    %v1416 = vpop.f32.mrf.mxu0
    %1417 = vmatprep.mubr.bf16.mxu0 0
    %1418 = vmatmul.mubr.bf16.gmra.mxu0 %v1230
    %v1419 = vpop.f32.mrf.mxu0
    %v1420 = vadd.f32 0.0, %v1419
    %v1421 = vpop.f32.mrf.mxu0
    %v1422 = vpop.f32.mrf.mxu0
    %v1423 = vadd.f32 0.0, %v1422
    %v1424 = vpop.f32.mrf.mxu0
    %1425 = vmatprep.mubr.bf16.mxu0 0
    %1426 = vmatmul.mubr.bf16.gmra.mxu0 %v1231
    %v1427 = vpop.f32.mrf.mxu0
    %v1428 = vadd.f32 0.0, %v1427
    %v1429 = vpop.f32.mrf.mxu0
    %v1430 = vpop.f32.mrf.mxu0
    %v1431 = vadd.f32 0.0, %v1430
    %v1432 = vpop.f32.mrf.mxu0
    %1433 = vmatprep.mubr.bf16.mxu0 0
    %1434 = vmatmul.mubr.bf16.gmra.mxu0 %v1232
    %v1435 = vpop.f32.mrf.mxu0
    %v1436 = vadd.f32 0.0, %v1435
    %v1437 = vpop.f32.mrf.mxu0
    %v1438 = vpop.f32.mrf.mxu0
    %v1439 = vadd.f32 0.0, %v1438
    %v1440 = vpop.f32.mrf.mxu0
    %1441 = vdwg.mxu0
    %v1442 = vpack.c.bf16 %v1216, %v1201
    %v1443 = vlaneseq
    %v1444 = vshrl.u32 %v1443, 7
    %v1445 = vsub.s32 0, %v1444
    %v1446 = vrot.slane %v1154, %v1445
    %v1463 = vunpack.c.l.b16 %v1138
    %v1464 = vunpack.c.l.b16 %v1139
    %v1465 = vunpack.c.l.b16 %v1140
    %v1466 = vunpack.c.l.b16 %v1141
    %v1467 = vunpack.c.l.b16 %v1142
    %v1468 = vunpack.c.l.b16 %v1143
    %v1469 = vunpack.c.l.b16 %v1144
    %v1470 = vunpack.c.l.b16 %v1145
    %v1471 = vunpack.c.l.b16 %v1146
    %v1472 = vunpack.c.l.b16 %v1147
    %v1473 = vunpack.c.l.b16 %v1148
    %v1474 = vunpack.c.l.b16 %v1149
    %v1475 = vunpack.c.l.b16 %v1150
    %v1476 = vunpack.c.l.b16 %v1151
    %v1477 = vunpack.c.l.b16 %v1152
    %v1478 = vunpack.c.l.b16 %v1153
    %v1479 = vpack.c.b16 %v1464, %v1463
    %v1480 = vpack.c.b16 %v1466, %v1465
    %v1481 = vpack.c.b16 %v1468, %v1467
    %v1482 = vpack.c.b16 %v1470, %v1469
    %v1483 = vpack.c.b16 %v1472, %v1471
    %v1484 = vpack.c.b16 %v1474, %v1473
    %v1485 = vpack.c.b16 %v1476, %v1475
    %v1486 = vpack.c.b16 %v1478, %v1477
    %1495 = vmatprep.subr.bf16.mxu0 0
    %1496 = vmatpush1.bf16.msra.mxu0 %v1486
    %1497 = vmatprep.subr.bf16.mxu0 0
    %1498 = vmatpush1.bf16.msra.mxu0 %v1485
    %1499 = vmatprep.subr.bf16.mxu0 0
    %1500 = vmatpush1.bf16.msra.mxu0 %v1484
    %1501 = vmatprep.subr.bf16.mxu0 0
    %1502 = vmatpush1.bf16.msra.mxu0 %v1483
    %1503 = vmatprep.subr.bf16.mxu0 0
    %1504 = vmatpush1.bf16.msra.mxu0 %v1482
    %1505 = vmatprep.subr.bf16.mxu0 0
    %1506 = vmatpush1.bf16.msra.mxu0 %v1481
    %1507 = vmatprep.subr.bf16.mxu0 0
    %1508 = vmatpush1.bf16.msra.mxu0 %v1480
    %1509 = vmatprep.subr.bf16.mxu0 0
    %1510 = vmatpush1.bf16.msra.mxu0 %v1479
    %1511 = vmatprep.subr.bf16.mxu0 0
    %1512 = vmatpush2.bf16.msra.mxu0 0
    %1513 = vmatprep.subr.bf16.mxu0 0
    %1514 = vmatpush2.bf16.msra.mxu0 0
    %1515 = vmatprep.subr.bf16.mxu0 0
    %1516 = vmatpush2.bf16.msra.mxu0 0
    %1517 = vmatprep.subr.bf16.mxu0 0
    %1518 = vmatpush2.bf16.msra.mxu0 0
    %1519 = vmatprep.subr.bf16.mxu0 0
    %1520 = vmatpush2.bf16.msra.mxu0 0
    %1521 = vmatprep.subr.bf16.mxu0 0
    %1522 = vmatpush2.bf16.msra.mxu0 0
    %1523 = vmatprep.subr.bf16.mxu0 0
    %1524 = vmatpush2.bf16.msra.mxu0 0
    %1525 = vmatprep.subr.bf16.mxu0 0
    %1526 = vmatpush2.bf16.msra.mxu0 0
    %1527 = vmatprep.mubr.bf16.mxu0 0
    %1528 = vmatmul.mubr.bf16.gmra.mxu0 %v1442
    %v1529 = vpop.f32.mrf.mxu0
    %v1530 = vadd.f32 %v1446, %v1529
    %v1531 = vpop.f32.mrf.mxu0
    %v1532 = vpop.f32.mrf.mxu0
    %v1533 = vadd.f32 %v1446, %v1532
    %v1534 = vpop.f32.mrf.mxu0
    %1535 = vdwg.mxu0
    %v1536 = vadd.f32 %v1316, %v1530
    %v1537 = vadd.f32 %v1319, %v1533
    %v1538 = vadd.f32 %v1324, %v1530
    %v1539 = vadd.f32 %v1327, %v1533
    %v1540 = vadd.f32 %v1332, %v1530
    %v1541 = vadd.f32 %v1335, %v1533
    %v1542 = vadd.f32 %v1340, %v1530
    %v1543 = vadd.f32 %v1343, %v1533
    %v1544 = vadd.f32 %v1348, %v1530
    %v1545 = vadd.f32 %v1351, %v1533
    %v1546 = vadd.f32 %v1356, %v1530
    %v1547 = vadd.f32 %v1359, %v1533
    %v1548 = vadd.f32 %v1364, %v1530
    %v1549 = vadd.f32 %v1367, %v1533
    %v1550 = vadd.f32 %v1372, %v1530
    %v1551 = vadd.f32 %v1375, %v1533
    %v1552 = vadd.f32 %v1380, %v1530
    %v1553 = vadd.f32 %v1383, %v1533
    %v1554 = vadd.f32 %v1388, %v1530
    %v1555 = vadd.f32 %v1391, %v1533
    %v1556 = vadd.f32 %v1396, %v1530
    %v1557 = vadd.f32 %v1399, %v1533
    %v1558 = vadd.f32 %v1404, %v1530
    %v1559 = vadd.f32 %v1407, %v1533
    %v1560 = vadd.f32 %v1412, %v1530
    %v1561 = vadd.f32 %v1415, %v1533
    %v1562 = vadd.f32 %v1420, %v1530
    %v1563 = vadd.f32 %v1423, %v1533
    %v1564 = vadd.f32 %v1428, %v1530
    %v1565 = vadd.f32 %v1431, %v1533
    %v1566 = vadd.f32 %v1436, %v1530
    %v1567 = vadd.f32 %v1439, %v1533
    %s1568 = scalar_lea.vmem [#allocation2], 320
    %v1569 = vld [vmem:[%s1568] sm:$0xf]
    %v1570 = vld [vmem:[%s1568 + $0x4] sm:$0xf]
    %v1571 = vld [vmem:[%s1568 + $0x8] sm:$0xf]
    %v1572 = vld [vmem:[%s1568 + $0xc] sm:$0xf]
    %v1573 = vld [vmem:[%s1568 + $0x10] sm:$0xf]
    %v1574 = vld [vmem:[%s1568 + $0x14] sm:$0xf]
    %v1575 = vld [vmem:[%s1568 + $0x18] sm:$0xf]
    %v1576 = vld [vmem:[%s1568 + $0x1c] sm:$0xf]
    %v1577 = vld [vmem:[%s1568 + $0x20] sm:$0xf]
    %v1578 = vld [vmem:[%s1568 + $0x24] sm:$0xf]
    %v1579 = vld [vmem:[%s1568 + $0x28] sm:$0xf]
    %v1580 = vld [vmem:[%s1568 + $0x2c] sm:$0xf]
    %v1581 = vld [vmem:[%s1568 + $0x30] sm:$0xf]
    %v1582 = vld [vmem:[%s1568 + $0x34] sm:$0xf]
    %v1583 = vld [vmem:[%s1568 + $0x38] sm:$0xf]
    %v1584 = vld [vmem:[%s1568 + $0x3c] sm:$0xf]
    %s1585 = scalar_lea.vmem [#allocation2], 384
    %v1586 = vld [vmem:[%s1585] sm:$0xf]
    %v1587 = vld [vmem:[%s1585 + $0x4] sm:$0xf]
    %v1588 = vld [vmem:[%s1585 + $0x8] sm:$0xf]
    %v1589 = vld [vmem:[%s1585 + $0xc] sm:$0xf]
    %v1590 = vld [vmem:[%s1585 + $0x10] sm:$0xf]
    %v1591 = vld [vmem:[%s1585 + $0x14] sm:$0xf]
    %v1592 = vld [vmem:[%s1585 + $0x18] sm:$0xf]
    %v1593 = vld [vmem:[%s1585 + $0x1c] sm:$0xf]
    %v1594 = vld [vmem:[%s1585 + $0x20] sm:$0xf]
    %v1595 = vld [vmem:[%s1585 + $0x24] sm:$0xf]
    %v1596 = vld [vmem:[%s1585 + $0x28] sm:$0xf]
    %v1597 = vld [vmem:[%s1585 + $0x2c] sm:$0xf]
    %v1598 = vld [vmem:[%s1585 + $0x30] sm:$0xf]
    %v1599 = vld [vmem:[%s1585 + $0x34] sm:$0xf]
    %v1600 = vld [vmem:[%s1585 + $0x38] sm:$0xf]
    %v1601 = vld [vmem:[%s1585 + $0x3c] sm:$0xf]
    %v1602 = vld [vmem:[%s2 + $0x7] sm:$0x1]
    %v1603 = vmax.f32 %v1536, 0.0
    %v1604 = vmax.f32 %v1537, 0.0
    %v1605 = vmax.f32 %v1538, 0.0
    %v1606 = vmax.f32 %v1539, 0.0
    %v1607 = vmax.f32 %v1540, 0.0
    %v1608 = vmax.f32 %v1541, 0.0
    %v1609 = vmax.f32 %v1542, 0.0
    %v1610 = vmax.f32 %v1543, 0.0
    %v1611 = vmax.f32 %v1544, 0.0
    %v1612 = vmax.f32 %v1545, 0.0
    %v1613 = vmax.f32 %v1546, 0.0
    %v1614 = vmax.f32 %v1547, 0.0
    %v1615 = vmax.f32 %v1548, 0.0
    %v1616 = vmax.f32 %v1549, 0.0
    %v1617 = vmax.f32 %v1550, 0.0
    %v1618 = vmax.f32 %v1551, 0.0
    %v1619 = vmax.f32 %v1552, 0.0
    %v1620 = vmax.f32 %v1553, 0.0
    %v1621 = vmax.f32 %v1554, 0.0
    %v1622 = vmax.f32 %v1555, 0.0
    %v1623 = vmax.f32 %v1556, 0.0
    %v1624 = vmax.f32 %v1557, 0.0
    %v1625 = vmax.f32 %v1558, 0.0
    %v1626 = vmax.f32 %v1559, 0.0
    %v1627 = vmax.f32 %v1560, 0.0
    %v1628 = vmax.f32 %v1561, 0.0
    %v1629 = vmax.f32 %v1562, 0.0
    %v1630 = vmax.f32 %v1563, 0.0
    %v1631 = vmax.f32 %v1564, 0.0
    %v1632 = vmax.f32 %v1565, 0.0
    %v1633 = vmax.f32 %v1566, 0.0
    %v1634 = vmax.f32 %v1567, 0.0
    %v1635 = vmax.f32 %v1603, %v1607
    %v1636 = vmax.f32 %v1605, %v1609
    %v1637 = vmax.f32 %v1635, %v1611
    %v1638 = vmax.f32 %v1636, %v1613
    %v1639 = vmax.f32 %v1637, %v1615
    %v1640 = vmax.f32 %v1638, %v1617
    %v1641 = vmax.f32 %v1639, %v1619
    %v1642 = vmax.f32 %v1640, %v1621
    %v1643 = vmax.f32 %v1641, %v1623
    %v1644 = vmax.f32 %v1642, %v1625
    %v1645 = vmax.f32 %v1643, %v1627
    %v1646 = vmax.f32 %v1644, %v1629
    %v1647 = vmax.f32 %v1645, %v1631
    %v1648 = vmax.f32 %v1646, %v1633
    %v1649 = vmax.f32 %v1647, %v1648
    %v1650 = vmax.f32 %v1604, %v1608
    %v1651 = vmax.f32 %v1606, %v1610
    %v1652 = vmax.f32 %v1650, %v1612
    %v1653 = vmax.f32 %v1651, %v1614
    %v1654 = vmax.f32 %v1652, %v1616
    %v1655 = vmax.f32 %v1653, %v1618
    %v1656 = vmax.f32 %v1654, %v1620
    %v1657 = vmax.f32 %v1655, %v1622
    %v1658 = vmax.f32 %v1656, %v1624
    %v1659 = vmax.f32 %v1657, %v1626
    %v1660 = vmax.f32 %v1658, %v1628
    %v1661 = vmax.f32 %v1659, %v1630
    %v1662 = vmax.f32 %v1660, %v1632
    %v1663 = vmax.f32 %v1661, %v1634
    %v1664 = vmax.f32 %v1662, %v1663
    %v1665 = vpack.c.bf16 %v1604, %v1603
    %v1666 = vpack.c.bf16 %v1606, %v1605
    %v1667 = vpack.c.bf16 %v1608, %v1607
    %v1668 = vpack.c.bf16 %v1610, %v1609
    %v1669 = vpack.c.bf16 %v1612, %v1611
    %v1670 = vpack.c.bf16 %v1614, %v1613
    %v1671 = vpack.c.bf16 %v1616, %v1615
    %v1672 = vpack.c.bf16 %v1618, %v1617
    %v1673 = vpack.c.bf16 %v1620, %v1619
    %v1674 = vpack.c.bf16 %v1622, %v1621
    %v1675 = vpack.c.bf16 %v1624, %v1623
    %v1676 = vpack.c.bf16 %v1626, %v1625
    %v1677 = vpack.c.bf16 %v1628, %v1627
    %v1678 = vpack.c.bf16 %v1630, %v1629
    %v1679 = vpack.c.bf16 %v1632, %v1631
    %v1680 = vpack.c.bf16 %v1634, %v1633
    %v1697 = vunpack.c.l.b16 %v1569
    %v1698 = vunpack.c.l.b16 %v1570
    %v1699 = vunpack.c.l.b16 %v1571
    %v1700 = vunpack.c.l.b16 %v1572
    %v1701 = vunpack.c.l.b16 %v1573
    %v1702 = vunpack.c.l.b16 %v1574
    %v1703 = vunpack.c.l.b16 %v1575
    %v1704 = vunpack.c.l.b16 %v1576
    %v1705 = vunpack.c.l.b16 %v1577
    %v1706 = vunpack.c.l.b16 %v1578
    %v1707 = vunpack.c.l.b16 %v1579
    %v1708 = vunpack.c.l.b16 %v1580
    %v1709 = vunpack.c.l.b16 %v1581
    %v1710 = vunpack.c.l.b16 %v1582
    %v1711 = vunpack.c.l.b16 %v1583
    %v1712 = vunpack.c.l.b16 %v1584
    %v1713 = vpack.c.b16 %v1698, %v1697
    %v1714 = vpack.c.b16 %v1700, %v1699
    %v1715 = vpack.c.b16 %v1702, %v1701
    %v1716 = vpack.c.b16 %v1704, %v1703
    %v1717 = vpack.c.b16 %v1706, %v1705
    %v1718 = vpack.c.b16 %v1708, %v1707
    %v1719 = vpack.c.b16 %v1710, %v1709
    %v1720 = vpack.c.b16 %v1712, %v1711
    %1729 = vmatprep.subr.bf16.mxu0 0
    %1730 = vmatpush1.bf16.msra.mxu0 %v1720
    %1731 = vmatprep.subr.bf16.mxu0 0
    %1732 = vmatpush1.bf16.msra.mxu0 %v1719
    %1733 = vmatprep.subr.bf16.mxu0 0
    %1734 = vmatpush1.bf16.msra.mxu0 %v1718
    %1735 = vmatprep.subr.bf16.mxu0 0
    %1736 = vmatpush1.bf16.msra.mxu0 %v1717
    %1737 = vmatprep.subr.bf16.mxu0 0
    %1738 = vmatpush1.bf16.msra.mxu0 %v1716
    %1739 = vmatprep.subr.bf16.mxu0 0
    %1740 = vmatpush1.bf16.msra.mxu0 %v1715
    %1741 = vmatprep.subr.bf16.mxu0 0
    %1742 = vmatpush1.bf16.msra.mxu0 %v1714
    %1743 = vmatprep.subr.bf16.mxu0 0
    %1744 = vmatpush1.bf16.msra.mxu0 %v1713
    %1745 = vmatprep.subr.bf16.mxu0 0
    %1746 = vmatpush2.bf16.msra.mxu0 0
    %1747 = vmatprep.subr.bf16.mxu0 0
    %1748 = vmatpush2.bf16.msra.mxu0 0
    %1749 = vmatprep.subr.bf16.mxu0 0
    %1750 = vmatpush2.bf16.msra.mxu0 0
    %1751 = vmatprep.subr.bf16.mxu0 0
    %1752 = vmatpush2.bf16.msra.mxu0 0
    %1753 = vmatprep.subr.bf16.mxu0 0
    %1754 = vmatpush2.bf16.msra.mxu0 0
    %1755 = vmatprep.subr.bf16.mxu0 0
    %1756 = vmatpush2.bf16.msra.mxu0 0
    %1757 = vmatprep.subr.bf16.mxu0 0
    %1758 = vmatpush2.bf16.msra.mxu0 0
    %1759 = vmatprep.subr.bf16.mxu0 0
    %1760 = vmatpush2.bf16.msra.mxu0 0
    %1761 = vmatprep.mubr.bf16.mxu0 0
    %1762 = vmatmul.mubr.bf16.gmra.mxu0 %v1665
    %v1763 = vpop.f32.mrf.mxu0
    %v1764 = vadd.f32 0.0, %v1763
    %v1765 = vpop.f32.mrf.mxu0
    %v1766 = vpop.f32.mrf.mxu0
    %v1767 = vadd.f32 0.0, %v1766
    %v1768 = vpop.f32.mrf.mxu0
    %1769 = vmatprep.mubr.bf16.mxu0 0
    %1770 = vmatmul.mubr.bf16.gmra.mxu0 %v1666
    %v1771 = vpop.f32.mrf.mxu0
    %v1772 = vadd.f32 0.0, %v1771
    %v1773 = vpop.f32.mrf.mxu0
    %v1774 = vpop.f32.mrf.mxu0
    %v1775 = vadd.f32 0.0, %v1774
    %v1776 = vpop.f32.mrf.mxu0
    %1777 = vmatprep.mubr.bf16.mxu0 0
    %1778 = vmatmul.mubr.bf16.gmra.mxu0 %v1667
    %v1779 = vpop.f32.mrf.mxu0
    %v1780 = vadd.f32 0.0, %v1779
    %v1781 = vpop.f32.mrf.mxu0
    %v1782 = vpop.f32.mrf.mxu0
    %v1783 = vadd.f32 0.0, %v1782
    %v1784 = vpop.f32.mrf.mxu0
    %1785 = vmatprep.mubr.bf16.mxu0 0
    %1786 = vmatmul.mubr.bf16.gmra.mxu0 %v1668
    %v1787 = vpop.f32.mrf.mxu0
    %v1788 = vadd.f32 0.0, %v1787
    %v1789 = vpop.f32.mrf.mxu0
    %v1790 = vpop.f32.mrf.mxu0
    %v1791 = vadd.f32 0.0, %v1790
    %v1792 = vpop.f32.mrf.mxu0
    %1793 = vmatprep.mubr.bf16.mxu0 0
    %1794 = vmatmul.mubr.bf16.gmra.mxu0 %v1669
    %v1795 = vpop.f32.mrf.mxu0
    %v1796 = vadd.f32 0.0, %v1795
    %v1797 = vpop.f32.mrf.mxu0
    %v1798 = vpop.f32.mrf.mxu0
    %v1799 = vadd.f32 0.0, %v1798
    %v1800 = vpop.f32.mrf.mxu0
    %1801 = vmatprep.mubr.bf16.mxu0 0
    %1802 = vmatmul.mubr.bf16.gmra.mxu0 %v1670
    %v1803 = vpop.f32.mrf.mxu0
    %v1804 = vadd.f32 0.0, %v1803
    %v1805 = vpop.f32.mrf.mxu0
    %v1806 = vpop.f32.mrf.mxu0
    %v1807 = vadd.f32 0.0, %v1806
    %v1808 = vpop.f32.mrf.mxu0
    %1809 = vmatprep.mubr.bf16.mxu0 0
    %1810 = vmatmul.mubr.bf16.gmra.mxu0 %v1671
    %v1811 = vpop.f32.mrf.mxu0
    %v1812 = vadd.f32 0.0, %v1811
    %v1813 = vpop.f32.mrf.mxu0
    %v1814 = vpop.f32.mrf.mxu0
    %v1815 = vadd.f32 0.0, %v1814
    %v1816 = vpop.f32.mrf.mxu0
    %1817 = vmatprep.mubr.bf16.mxu0 0
    %1818 = vmatmul.mubr.bf16.gmra.mxu0 %v1672
    %v1819 = vpop.f32.mrf.mxu0
    %v1820 = vadd.f32 0.0, %v1819
    %v1821 = vpop.f32.mrf.mxu0
    %v1822 = vpop.f32.mrf.mxu0
    %v1823 = vadd.f32 0.0, %v1822
    %v1824 = vpop.f32.mrf.mxu0
    %1825 = vmatprep.mubr.bf16.mxu0 0
    %1826 = vmatmul.mubr.bf16.gmra.mxu0 %v1673
    %v1827 = vpop.f32.mrf.mxu0
    %v1828 = vadd.f32 0.0, %v1827
    %v1829 = vpop.f32.mrf.mxu0
    %v1830 = vpop.f32.mrf.mxu0
    %v1831 = vadd.f32 0.0, %v1830
    %v1832 = vpop.f32.mrf.mxu0
    %1833 = vmatprep.mubr.bf16.mxu0 0
    %1834 = vmatmul.mubr.bf16.gmra.mxu0 %v1674
    %v1835 = vpop.f32.mrf.mxu0
    %v1836 = vadd.f32 0.0, %v1835
    %v1837 = vpop.f32.mrf.mxu0
    %v1838 = vpop.f32.mrf.mxu0
    %v1839 = vadd.f32 0.0, %v1838
    %v1840 = vpop.f32.mrf.mxu0
    %1841 = vmatprep.mubr.bf16.mxu0 0
    %1842 = vmatmul.mubr.bf16.gmra.mxu0 %v1675
    %v1843 = vpop.f32.mrf.mxu0
    %v1844 = vadd.f32 0.0, %v1843
    %v1845 = vpop.f32.mrf.mxu0
    %v1846 = vpop.f32.mrf.mxu0
    %v1847 = vadd.f32 0.0, %v1846
    %v1848 = vpop.f32.mrf.mxu0
    %1849 = vmatprep.mubr.bf16.mxu0 0
    %1850 = vmatmul.mubr.bf16.gmra.mxu0 %v1676
    %v1851 = vpop.f32.mrf.mxu0
    %v1852 = vadd.f32 0.0, %v1851
    %v1853 = vpop.f32.mrf.mxu0
    %v1854 = vpop.f32.mrf.mxu0
    %v1855 = vadd.f32 0.0, %v1854
    %v1856 = vpop.f32.mrf.mxu0
    %1857 = vmatprep.mubr.bf16.mxu0 0
    %1858 = vmatmul.mubr.bf16.gmra.mxu0 %v1677
    %v1859 = vpop.f32.mrf.mxu0
    %v1860 = vadd.f32 0.0, %v1859
    %v1861 = vpop.f32.mrf.mxu0
    %v1862 = vpop.f32.mrf.mxu0
    %v1863 = vadd.f32 0.0, %v1862
    %v1864 = vpop.f32.mrf.mxu0
    %1865 = vmatprep.mubr.bf16.mxu0 0
    %1866 = vmatmul.mubr.bf16.gmra.mxu0 %v1678
    %v1867 = vpop.f32.mrf.mxu0
    %v1868 = vadd.f32 0.0, %v1867
    %v1869 = vpop.f32.mrf.mxu0
    %v1870 = vpop.f32.mrf.mxu0
    %v1871 = vadd.f32 0.0, %v1870
    %v1872 = vpop.f32.mrf.mxu0
    %1873 = vmatprep.mubr.bf16.mxu0 0
    %1874 = vmatmul.mubr.bf16.gmra.mxu0 %v1679
    %v1875 = vpop.f32.mrf.mxu0
    %v1876 = vadd.f32 0.0, %v1875
    %v1877 = vpop.f32.mrf.mxu0
    %v1878 = vpop.f32.mrf.mxu0
    %v1879 = vadd.f32 0.0, %v1878
    %v1880 = vpop.f32.mrf.mxu0
    %1881 = vmatprep.mubr.bf16.mxu0 0
    %1882 = vmatmul.mubr.bf16.gmra.mxu0 %v1680
    %v1883 = vpop.f32.mrf.mxu0
    %v1884 = vadd.f32 0.0, %v1883
    %v1885 = vpop.f32.mrf.mxu0
    %v1886 = vpop.f32.mrf.mxu0
    %v1887 = vadd.f32 0.0, %v1886
    %v1888 = vpop.f32.mrf.mxu0
    %1889 = vdwg.mxu0
    %v1890 = vpack.c.bf16 %v1664, %v1649
    %v1891 = vlaneseq
    %v1892 = vshrl.u32 %v1891, 7
    %v1893 = vsub.s32 0, %v1892
    %v1894 = vrot.slane %v1602, %v1893
    %v1911 = vunpack.c.l.b16 %v1586
    %v1912 = vunpack.c.l.b16 %v1587
    %v1913 = vunpack.c.l.b16 %v1588
    %v1914 = vunpack.c.l.b16 %v1589
    %v1915 = vunpack.c.l.b16 %v1590
    %v1916 = vunpack.c.l.b16 %v1591
    %v1917 = vunpack.c.l.b16 %v1592
    %v1918 = vunpack.c.l.b16 %v1593
    %v1919 = vunpack.c.l.b16 %v1594
    %v1920 = vunpack.c.l.b16 %v1595
    %v1921 = vunpack.c.l.b16 %v1596
    %v1922 = vunpack.c.l.b16 %v1597
    %v1923 = vunpack.c.l.b16 %v1598
    %v1924 = vunpack.c.l.b16 %v1599
    %v1925 = vunpack.c.l.b16 %v1600
    %v1926 = vunpack.c.l.b16 %v1601
    %v1927 = vpack.c.b16 %v1912, %v1911
    %v1928 = vpack.c.b16 %v1914, %v1913
    %v1929 = vpack.c.b16 %v1916, %v1915
    %v1930 = vpack.c.b16 %v1918, %v1917
    %v1931 = vpack.c.b16 %v1920, %v1919
    %v1932 = vpack.c.b16 %v1922, %v1921
    %v1933 = vpack.c.b16 %v1924, %v1923
    %v1934 = vpack.c.b16 %v1926, %v1925
    %1943 = vmatprep.subr.bf16.mxu0 0
    %1944 = vmatpush1.bf16.msra.mxu0 %v1934
    %1945 = vmatprep.subr.bf16.mxu0 0
    %1946 = vmatpush1.bf16.msra.mxu0 %v1933
    %1947 = vmatprep.subr.bf16.mxu0 0
    %1948 = vmatpush1.bf16.msra.mxu0 %v1932
    %1949 = vmatprep.subr.bf16.mxu0 0
    %1950 = vmatpush1.bf16.msra.mxu0 %v1931
    %1951 = vmatprep.subr.bf16.mxu0 0
    %1952 = vmatpush1.bf16.msra.mxu0 %v1930
    %1953 = vmatprep.subr.bf16.mxu0 0
    %1954 = vmatpush1.bf16.msra.mxu0 %v1929
    %1955 = vmatprep.subr.bf16.mxu0 0
    %1956 = vmatpush1.bf16.msra.mxu0 %v1928
    %1957 = vmatprep.subr.bf16.mxu0 0
    %1958 = vmatpush1.bf16.msra.mxu0 %v1927
    %1959 = vmatprep.subr.bf16.mxu0 0
    %1960 = vmatpush2.bf16.msra.mxu0 0
    %1961 = vmatprep.subr.bf16.mxu0 0
    %1962 = vmatpush2.bf16.msra.mxu0 0
    %1963 = vmatprep.subr.bf16.mxu0 0
    %1964 = vmatpush2.bf16.msra.mxu0 0
    %1965 = vmatprep.subr.bf16.mxu0 0
    %1966 = vmatpush2.bf16.msra.mxu0 0
    %1967 = vmatprep.subr.bf16.mxu0 0
    %1968 = vmatpush2.bf16.msra.mxu0 0
    %1969 = vmatprep.subr.bf16.mxu0 0
    %1970 = vmatpush2.bf16.msra.mxu0 0
    %1971 = vmatprep.subr.bf16.mxu0 0
    %1972 = vmatpush2.bf16.msra.mxu0 0
    %1973 = vmatprep.subr.bf16.mxu0 0
    %1974 = vmatpush2.bf16.msra.mxu0 0
    %1975 = vmatprep.mubr.bf16.mxu0 0
    %1976 = vmatmul.mubr.bf16.gmra.mxu0 %v1890
    %v1977 = vpop.f32.mrf.mxu0
    %v1978 = vadd.f32 %v1894, %v1977
    %v1979 = vpop.f32.mrf.mxu0
    %v1980 = vpop.f32.mrf.mxu0
    %v1981 = vadd.f32 %v1894, %v1980
    %v1982 = vpop.f32.mrf.mxu0
    %1983 = vdwg.mxu0
    %v1984 = vadd.f32 %v1764, %v1978
    %v1985 = vadd.f32 %v1767, %v1981
    %v1986 = vadd.f32 %v1772, %v1978
    %v1987 = vadd.f32 %v1775, %v1981
    %v1988 = vadd.f32 %v1780, %v1978
    %v1989 = vadd.f32 %v1783, %v1981
    %v1990 = vadd.f32 %v1788, %v1978
    %v1991 = vadd.f32 %v1791, %v1981
    %v1992 = vadd.f32 %v1796, %v1978
    %v1993 = vadd.f32 %v1799, %v1981
    %v1994 = vadd.f32 %v1804, %v1978
    %v1995 = vadd.f32 %v1807, %v1981
    %v1996 = vadd.f32 %v1812, %v1978
    %v1997 = vadd.f32 %v1815, %v1981
    %v1998 = vadd.f32 %v1820, %v1978
    %v1999 = vadd.f32 %v1823, %v1981
    %v2000 = vadd.f32 %v1828, %v1978
    %v2001 = vadd.f32 %v1831, %v1981
    %v2002 = vadd.f32 %v1836, %v1978
    %v2003 = vadd.f32 %v1839, %v1981
    %v2004 = vadd.f32 %v1844, %v1978
    %v2005 = vadd.f32 %v1847, %v1981
    %v2006 = vadd.f32 %v1852, %v1978
    %v2007 = vadd.f32 %v1855, %v1981
    %v2008 = vadd.f32 %v1860, %v1978
    %v2009 = vadd.f32 %v1863, %v1981
    %v2010 = vadd.f32 %v1868, %v1978
    %v2011 = vadd.f32 %v1871, %v1981
    %v2012 = vadd.f32 %v1876, %v1978
    %v2013 = vadd.f32 %v1879, %v1981
    %v2014 = vadd.f32 %v1884, %v1978
    %v2015 = vadd.f32 %v1887, %v1981
    %v2016 = vmax.f32 %v1984, 0.0
    %v2017 = vmax.f32 %v1985, 0.0
    %v2018 = vmax.f32 %v1986, 0.0
    %v2019 = vmax.f32 %v1987, 0.0
    %v2020 = vmax.f32 %v1988, 0.0
    %v2021 = vmax.f32 %v1989, 0.0
    %v2022 = vmax.f32 %v1990, 0.0
    %v2023 = vmax.f32 %v1991, 0.0
    %v2024 = vmax.f32 %v1992, 0.0
    %v2025 = vmax.f32 %v1993, 0.0
    %v2026 = vmax.f32 %v1994, 0.0
    %v2027 = vmax.f32 %v1995, 0.0
    %v2028 = vmax.f32 %v1996, 0.0
    %v2029 = vmax.f32 %v1997, 0.0
    %v2030 = vmax.f32 %v1998, 0.0
    %v2031 = vmax.f32 %v1999, 0.0
    %v2032 = vmax.f32 %v2000, 0.0
    %v2033 = vmax.f32 %v2001, 0.0
    %v2034 = vmax.f32 %v2002, 0.0
    %v2035 = vmax.f32 %v2003, 0.0
    %v2036 = vmax.f32 %v2004, 0.0
    %v2037 = vmax.f32 %v2005, 0.0
    %v2038 = vmax.f32 %v2006, 0.0
    %v2039 = vmax.f32 %v2007, 0.0
    %v2040 = vmax.f32 %v2008, 0.0
    %v2041 = vmax.f32 %v2009, 0.0
    %v2042 = vmax.f32 %v2010, 0.0
    %v2043 = vmax.f32 %v2011, 0.0
    %v2044 = vmax.f32 %v2012, 0.0
    %v2045 = vmax.f32 %v2013, 0.0
    %v2046 = vmax.f32 %v2014, 0.0
    %v2047 = vmax.f32 %v2015, 0.0
    %v2048 = vmax.f32 %v2016, %v2020
    %v2049 = vmax.f32 %v2018, %v2022
    %v2050 = vmax.f32 %v2048, %v2024
    %v2051 = vmax.f32 %v2049, %v2026
    %v2052 = vmax.f32 %v2050, %v2028
    %v2053 = vmax.f32 %v2051, %v2030
    %v2054 = vmax.f32 %v2052, %v2032
    %v2055 = vmax.f32 %v2053, %v2034
    %v2056 = vmax.f32 %v2054, %v2036
    %v2057 = vmax.f32 %v2055, %v2038
    %v2058 = vmax.f32 %v2056, %v2040
    %v2059 = vmax.f32 %v2057, %v2042
    %v2060 = vmax.f32 %v2058, %v2044
    %v2061 = vmax.f32 %v2059, %v2046
    %v2062 = vmax.f32 %v2060, %v2061
    %v2063 = vmax.f32 %v2017, %v2021
    %v2064 = vmax.f32 %v2019, %v2023
    %v2065 = vmax.f32 %v2063, %v2025
    %v2066 = vmax.f32 %v2064, %v2027
    %v2067 = vmax.f32 %v2065, %v2029
    %v2068 = vmax.f32 %v2066, %v2031
    %v2069 = vmax.f32 %v2067, %v2033
    %v2070 = vmax.f32 %v2068, %v2035
    %v2071 = vmax.f32 %v2069, %v2037
    %v2072 = vmax.f32 %v2070, %v2039
    %v2073 = vmax.f32 %v2071, %v2041
    %v2074 = vmax.f32 %v2072, %v2043
    %v2075 = vmax.f32 %v2073, %v2045
    %v2076 = vmax.f32 %v2074, %v2047
    %v2077 = vmax.f32 %v2075, %v2076
    %s2078 = scalar_lea.vmem [#allocation2], 448
    %v2079 = vld [vmem:[%s2078] sm:$0xf]
    %v2080 = vld [vmem:[%s2078 + $0x4] sm:$0xf]
    %v2081 = vld [vmem:[%s2078 + $0x8] sm:$0xf]
    %v2082 = vld [vmem:[%s2078 + $0xc] sm:$0xf]
    %v2083 = vld [vmem:[%s2078 + $0x10] sm:$0xf]
    %v2084 = vld [vmem:[%s2078 + $0x14] sm:$0xf]
    %v2085 = vld [vmem:[%s2078 + $0x18] sm:$0xf]
    %v2086 = vld [vmem:[%s2078 + $0x1c] sm:$0xf]
    %v2087 = vld [vmem:[%s2078 + $0x20] sm:$0xf]
    %v2088 = vld [vmem:[%s2078 + $0x24] sm:$0xf]
    %v2089 = vld [vmem:[%s2078 + $0x28] sm:$0xf]
    %v2090 = vld [vmem:[%s2078 + $0x2c] sm:$0xf]
    %v2091 = vld [vmem:[%s2078 + $0x30] sm:$0xf]
    %v2092 = vld [vmem:[%s2078 + $0x34] sm:$0xf]
    %v2093 = vld [vmem:[%s2078 + $0x38] sm:$0xf]
    %v2094 = vld [vmem:[%s2078 + $0x3c] sm:$0xf]
    %v2095 = vpack.c.bf16 %v2077, %v2062
    %v2096 = vld [vmem:[%s2 + $0x8] sm:$0x1]
    %v2097 = vlaneseq
    %v2098 = vshrl.u32 %v2097, 7
    %v2099 = vsub.s32 0, %v2098
    %v2100 = vrot.slane %v2096, %v2099
    %v2117 = vunpack.c.l.b16 %v2079
    %v2118 = vunpack.c.l.b16 %v2080
    %v2119 = vunpack.c.l.b16 %v2081
    %v2120 = vunpack.c.l.b16 %v2082
    %v2121 = vunpack.c.l.b16 %v2083
    %v2122 = vunpack.c.l.b16 %v2084
    %v2123 = vunpack.c.l.b16 %v2085
    %v2124 = vunpack.c.l.b16 %v2086
    %v2125 = vunpack.c.l.b16 %v2087
    %v2126 = vunpack.c.l.b16 %v2088
    %v2127 = vunpack.c.l.b16 %v2089
    %v2128 = vunpack.c.l.b16 %v2090
    %v2129 = vunpack.c.l.b16 %v2091
    %v2130 = vunpack.c.l.b16 %v2092
    %v2131 = vunpack.c.l.b16 %v2093
    %v2132 = vunpack.c.l.b16 %v2094
    %v2133 = vpack.c.b16 %v2118, %v2117
    %v2134 = vpack.c.b16 %v2120, %v2119
    %v2135 = vpack.c.b16 %v2122, %v2121
    %v2136 = vpack.c.b16 %v2124, %v2123
    %v2137 = vpack.c.b16 %v2126, %v2125
    %v2138 = vpack.c.b16 %v2128, %v2127
    %v2139 = vpack.c.b16 %v2130, %v2129
    %v2140 = vpack.c.b16 %v2132, %v2131
    %2149 = vmatprep.subr.bf16.mxu0 0
    %2150 = vmatpush1.bf16.msra.mxu0 %v2140
    %2151 = vmatprep.subr.bf16.mxu0 0
    %2152 = vmatpush1.bf16.msra.mxu0 %v2139
    %2153 = vmatprep.subr.bf16.mxu0 0
    %2154 = vmatpush1.bf16.msra.mxu0 %v2138
    %2155 = vmatprep.subr.bf16.mxu0 0
    %2156 = vmatpush1.bf16.msra.mxu0 %v2137
    %2157 = vmatprep.subr.bf16.mxu0 0
    %2158 = vmatpush1.bf16.msra.mxu0 %v2136
    %2159 = vmatprep.subr.bf16.mxu0 0
    %2160 = vmatpush1.bf16.msra.mxu0 %v2135
    %2161 = vmatprep.subr.bf16.mxu0 0
    %2162 = vmatpush1.bf16.msra.mxu0 %v2134
    %2163 = vmatprep.subr.bf16.mxu0 0
    %2164 = vmatpush1.bf16.msra.mxu0 %v2133
    %2165 = vmatprep.subr.bf16.mxu0 0
    %2166 = vmatpush2.bf16.msra.mxu0 0
    %2167 = vmatprep.subr.bf16.mxu0 0
    %2168 = vmatpush2.bf16.msra.mxu0 0
    %2169 = vmatprep.subr.bf16.mxu0 0
    %2170 = vmatpush2.bf16.msra.mxu0 0
    %2171 = vmatprep.subr.bf16.mxu0 0
    %2172 = vmatpush2.bf16.msra.mxu0 0
    %2173 = vmatprep.subr.bf16.mxu0 0
    %2174 = vmatpush2.bf16.msra.mxu0 0
    %2175 = vmatprep.subr.bf16.mxu0 0
    %2176 = vmatpush2.bf16.msra.mxu0 0
    %2177 = vmatprep.subr.bf16.mxu0 0
    %2178 = vmatpush2.bf16.msra.mxu0 0
    %2179 = vmatprep.subr.bf16.mxu0 0
    %2180 = vmatpush2.bf16.msra.mxu0 0
    %2181 = vmatprep.mubr.bf16.mxu0 0
    %2182 = vmatmul.mubr.bf16.gmra.mxu0 %v2095
    %v2183 = vpop.f32.mrf.mxu0
    %v2184 = vadd.f32 %v2100, %v2183
    %v2185 = vpop.f32.mrf.mxu0
    %v2186 = vpop.f32.mrf.mxu0
    %v2187 = vadd.f32 %v2100, %v2186
    %v2188 = vpop.f32.mrf.mxu0
    %2189 = vdwg.mxu0
    %2190 = vst [vmem:[#allocation5] sm:$0xff] %v2184
    %2191 = vst [vmem:[#allocation5 + $0x8] sm:$0xff] %v2187
    // Predicated region
    $region18: #{tpu_custom_call.1} parent=1 // pred_check
      _
    $region19: #{tpu_custom_call.1} parent=1 // pred_check_branch
      %2193 = sbr.rel (0) target = $region21
    $region20: #{tpu_custom_call.1} parent=1 // pred_region
      %s2195 = ssub.s32 256, 256
      %2196 = vsyncadd [#allocation4], %s2195
      %s2197 = sshll.u32 [#allocation5], 4
      %s2198 = int_to_ptr.vmem [resolvable:$true] %s2197
      %2203 = dma.vmem_to_hbm [thread:$0]  %s2198, 256, %s3, [#allocation4], 128, 128, 8
    $region21: #{tpu_custom_call.1} parent=1 // pred_fallthru
      _
    // Predicated region
    $region22: #{tpu_custom_call.1} parent=1 // pred_check
      _
    $region23: #{tpu_custom_call.1} parent=1 // pred_check_branch
      %2205 = sbr.rel (0) target = $region25
    $region24: #{tpu_custom_call.1} parent=1 // pred_region
      %2206 = dma.done [#allocation4], 256
    $region25: #{tpu_custom_call.1} parent=1 // pred_fallthru
      _
    %2207 = vsyncpa [#allocation3], 1
    %2208 = vsyncpa [#allocation4], 1

</llo_original>
